<compile_context>
chip_gen: v6e
topology: v6e:2x2x1
jax: 0.10.0
libtpu: 0.0.40
codegen_flags: <defaults>
</compile_context>

<pallas_src>
import numpy as np
import jax
import jax.numpy as jnp
from jax.experimental import pallas as pl
from jax.experimental.pallas import tpu as pltpu

LANE = 128      # pad every layer dim (d_in / d_out) to this lane width
SUBLANE = 8     # pad batch to a multiple of this


def _round_up(x, m):
    return ((x + m - 1) // m) * m


# --------------------------------------------------------------------------
# Kernel
# --------------------------------------------------------------------------
def _mlp_kernel(x_ref, w_ref, b_ref, o_ref):
    """x_ref: (TB,128) f32   w_ref: (L,128,128) bf16   b_ref: (L,1,128) bf16
       o_ref: (TB,128) f32."""
    h = x_ref[...]                              # f32 activations, lane-dense
    n_layers = w_ref.shape[0]
    # TODO(synk): on v6e/v7x the inter-layer activation could be carried in
    # bf16 (native VPU bf16); kept f32 here so the same kernel is safe/optimal
    # on v5e as well.
    for i in range(n_layers):                   # static unroll over 8 layers
        w = w_ref[i]                            # (128,128) bf16 MXU tile
        b = b_ref[i].astype(jnp.float32)        # (1,128) f32 bias
        acc = jnp.dot(h.astype(jnp.bfloat16), w,
                      preferred_element_type=jnp.float32)
        h = jnp.maximum(acc + b, 0.0)
    o_ref[...] = h.astype(o_ref.dtype)


# --------------------------------------------------------------------------
# pallas_call wrapper
# --------------------------------------------------------------------------
def linear_nn_forward(x_padded, w_packed, b_packed, *, batch_block=1024):
    """x_padded: (B_pad,128) f32; w_packed: (L,128,128) bf16; b_packed: (L,1,128) bf16."""
    B_pad, D = x_padded.shape
    assert D == LANE and B_pad % SUBLANE == 0
    tb = min(batch_block, B_pad)
    assert B_pad % tb == 0, "batch must be padded to a multiple of the tile"
    grid = (B_pad // tb,)
    out_shape = jax.ShapeDtypeStruct((B_pad, LANE), jnp.float32)

    def build(single_buffer_slabs):
        extra = {"pipeline_mode": pl.Buffered(1)} if single_buffer_slabs else {}
        return pl.pallas_call(
            _mlp_kernel,
            grid=grid,
            in_specs=[
                pl.BlockSpec((tb, LANE), lambda i: (i, 0)),            # batch tile
                pl.BlockSpec(w_packed.shape, lambda i: (0, 0, 0), **extra),  # resident weights
                pl.BlockSpec(b_packed.shape, lambda i: (0, 0, 0), **extra),  # resident biases
            ],
            out_specs=pl.BlockSpec((tb, LANE), lambda i: (i, 0)),      # lane-dense output
            out_shape=out_shape,
            compiler_params=pltpu.CompilerParams(
                dimension_semantics=("parallel",)),   # shard batch tiles across TCs (v7x)
        )

    try:
        return build(True)(x_padded, w_packed, b_packed)
    except Exception:
        # pipeline_mode=pl.Buffered(1) unsupported in this JAX version; the
        # default double-buffered spec only costs ~0.25 MiB of extra VMEM.
        return build(False)(x_padded, w_packed, b_packed)


def linear_nn_apply(x, w_packed, b_packed, out_features, *, batch_block=1024):
    """x: (B, in_features) f32 -> (B, out_features) f32."""
    B, d_in = x.shape
    assert d_in <= LANE
    B_pad = _round_up(B, SUBLANE)
    # Cap the tile so batches > 8 rows split into >= 2 parallel grid tiles
    # (keeps both v7x TensorCores busy); then pad the batch up to a multiple
    # of the tile so there is never a partial tail tile.
    tb = min(batch_block, B_pad)
    if B_pad > SUBLANE:
        tb = min(tb, _round_up(pl.cdiv(B_pad, 2), SUBLANE))
    B_pad = _round_up(B_pad, tb)
    # Single-pass pad (zeros + .at[].set would be two HBM passes as XLA ops).
    x_pad = jnp.pad(x.astype(jnp.float32), ((0, B_pad - B), (0, LANE - d_in)))
    out_pad = linear_nn_forward(x_pad, w_packed, b_packed, batch_block=tb)
    return out_pad[:B, :out_features]


# --------------------------------------------------------------------------
# Parameter construction (mirrors LinearNN.__init__)
# --------------------------------------------------------------------------
def make_layer_dims(in_features, out_features, layers_num=5):
    encode_dims = np.linspace(in_features, int(in_features * 0.3), layers_num).astype(int)
    decoder_dims = np.linspace(int(in_features * 0.3), out_features, layers_num).astype(int)
    dims = [int(d) for d in encode_dims] + [int(d) for d in decoder_dims[1:]]
    return dims  # length 9 -> 8 linear layers


def init_params(key, dims):
    """Deterministic init mimicking nn.Linear's U(-1/sqrt(fan_in), 1/sqrt(fan_in))."""
    weights, biases = [], []
    for d_in, d_out in zip(dims[:-1], dims[1:]):
        key, kw, kb = jax.random.split(key, 3)
        bound = 1.0 / np.sqrt(d_in)
        w = jax.random.uniform(kw, (d_in, d_out), jnp.float32, -bound, bound)
        b = jax.random.uniform(kb, (1, d_out), jnp.float32, -bound, bound)
        weights.append(w)
        biases.append(b)
    return weights, biases


def pack_params(weights, biases, pad=LANE):
    """Zero-pad each layer to (pad,pad), stack into two contiguous bf16 slabs."""
    n = len(weights)
    w_packed = np.zeros((n, pad, pad), np.float32)
    b_packed = np.zeros((n, 1, pad), np.float32)
    for i, (w, b) in enumerate(zip(weights, biases)):
        d_in, d_out = w.shape
        w_packed[i, :d_in, :d_out] = np.asarray(w)
        b_packed[i, 0, :d_out] = np.asarray(b).reshape(-1)
    # bf16 storage halves the weight-slab DMA; f32 accumulation is preserved
    # in-kernel via preferred_element_type=float32.
    # TODO(synk): on v7x, fp8 weight storage (and bf16 output) could shrink
    # HBM traffic further if precision allows.
    return (jnp.asarray(w_packed).astype(jnp.bfloat16),
            jnp.asarray(b_packed).astype(jnp.bfloat16))


def reference_forward(x, weights, biases):
    h = x
    for w, b in zip(weights, biases):
        h = jnp.maximum(h @ w + b, 0.0)
    return h


# --------------------------------------------------------------------------
# Demo / correctness check
# --------------------------------------------------------------------------
if __name__ == "__main__":
    in_features, out_features = 32, 16
    dims = make_layer_dims(in_features, out_features)  # [32, 26, 20, 14, 9, 10, 12, 14, 16]

    key = jax.random.PRNGKey(0)
    key, kparams = jax.random.split(key)
    weights, biases = init_params(kparams, dims)
    w_packed, b_packed = pack_params(weights, biases)   # pack once, reuse per call

    for batch in (8, 32):   # exercises grid=(1,) and the >=2-tile (v7x) path
        key, kx = jax.random.split(key)
        x = jax.random.normal(kx, (batch, in_features), jnp.float32)

        out = jax.block_until_ready(
            linear_nn_apply(x, w_packed, b_packed, out_features))
        ref = reference_forward(x, weights, biases)

        assert out.shape == (batch, out_features), out.shape
        # bf16 weights + bf16 MXU inputs -> loosened tolerance vs f32 reference.
        np.testing.assert_allclose(np.asarray(out), np.asarray(ref),
                                   rtol=5e-2, atol=1e-2)

    print("KERNEL_OK")
</pallas_src>

<mosaic_0001>
module attributes {stable_mosaic.version = 11 : i64} {
  func.func @_mlp_kernel(%arg0: i32, %arg1: memref<8x128xf32, #tpu.memory_space<vmem>>, %arg2: memref<8x128x128xbf16, #tpu.memory_space<vmem>>, %arg3: memref<8x1x128xbf16, #tpu.memory_space<vmem>>, %arg4: memref<8x128xf32, #tpu.memory_space<vmem>>) attributes {dimension_semantics = [#tpu.dimension_semantics<parallel>], iteration_bounds = array<i64: 1>, scalar_prefetch = 0 : i64, scratch_operands = 0 : i64, tpu.core_type = #tpu.core_type<tc>, window_params = [{transform_indices = @transform_0, window_bounds = array<i64: 8, 128>}, {pipeline_mode = #tpu.pipeline_mode<synchronous>, transform_indices = @transform_1, window_bounds = array<i64: 8, 128, 128>}, {pipeline_mode = #tpu.pipeline_mode<synchronous>, transform_indices = @transform_2, window_bounds = array<i64: 8, 1, 128>}, {transform_indices = @transform_3, window_bounds = array<i64: 8, 128>}]} {
    %c0 = arith.constant 0 : index
    %c0_0 = arith.constant 0 : index
    %0 = vector.load %arg1[%c0, %c0_0] : memref<8x128xf32, #tpu.memory_space<vmem>>, vector<8x128xf32>
    %c0_1 = arith.constant 0 : index
    %c0_2 = arith.constant 0 : index
    %c0_3 = arith.constant 0 : index
    %1 = vector.load %arg2[%c0_1, %c0_2, %c0_3] : memref<8x128x128xbf16, #tpu.memory_space<vmem>>, vector<1x128x128xbf16>
    %2 = vector.shape_cast %1 : vector<1x128x128xbf16> to vector<128x128xbf16>
    %c0_4 = arith.constant 0 : index
    %c0_5 = arith.constant 0 : index
    %c0_6 = arith.constant 0 : index
    %3 = vector.load %arg3[%c0_4, %c0_5, %c0_6] : memref<8x1x128xbf16, #tpu.memory_space<vmem>>, vector<1x1x128xbf16>
    %4 = vector.shape_cast %3 : vector<1x1x128xbf16> to vector<1x128xbf16>
    %5 = arith.extf %4 : vector<1x128xbf16> to vector<1x128xf32>
    %6 = arith.truncf %0 : vector<8x128xf32> to vector<8x128xbf16>
    %cst = arith.constant dense<0.000000e+00> : vector<8x128xf32>
    %7 = tpu.matmul %6, %2, %cst {dimension_numbers = #tpu.dot_dimension_numbers<[1], [0], [0], [1], [0, 0, 1, 1], [], []>} : vector<8x128xbf16>, vector<128x128xbf16>, vector<8x128xf32> -> vector<8x128xf32>
    %8 = vector.broadcast %5 : vector<1x128xf32> to vector<8x128xf32>
    %9 = arith.addf %7, %8 : vector<8x128xf32>
    %cst_7 = arith.constant 0.000000e+00 : f32
    %10 = vector.broadcast %cst_7 : f32 to vector<8x128xf32>
    %11 = arith.maximumf %9, %10 : vector<8x128xf32>
    %c1 = arith.constant 1 : index
    %c0_8 = arith.constant 0 : index
    %c0_9 = arith.constant 0 : index
    %12 = vector.load %arg2[%c1, %c0_8, %c0_9] : memref<8x128x128xbf16, #tpu.memory_space<vmem>>, vector<1x128x128xbf16>
    %13 = vector.shape_cast %12 : vector<1x128x128xbf16> to vector<128x128xbf16>
    %c1_10 = arith.constant 1 : index
    %c0_11 = arith.constant 0 : index
    %c0_12 = arith.constant 0 : index
    %14 = vector.load %arg3[%c1_10, %c0_11, %c0_12] : memref<8x1x128xbf16, #tpu.memory_space<vmem>>, vector<1x1x128xbf16>
    %15 = vector.shape_cast %14 : vector<1x1x128xbf16> to vector<1x128xbf16>
    %16 = arith.extf %15 : vector<1x128xbf16> to vector<1x128xf32>
    %17 = arith.truncf %11 : vector<8x128xf32> to vector<8x128xbf16>
    %cst_13 = arith.constant dense<0.000000e+00> : vector<8x128xf32>
    %18 = tpu.matmul %17, %13, %cst_13 {dimension_numbers = #tpu.dot_dimension_numbers<[1], [0], [0], [1], [0, 0, 1, 1], [], []>} : vector<8x128xbf16>, vector<128x128xbf16>, vector<8x128xf32> -> vector<8x128xf32>
    %19 = vector.broadcast %16 : vector<1x128xf32> to vector<8x128xf32>
    %20 = arith.addf %18, %19 : vector<8x128xf32>
    %cst_14 = arith.constant 0.000000e+00 : f32
    %21 = vector.broadcast %cst_14 : f32 to vector<8x128xf32>
    %22 = arith.maximumf %20, %21 : vector<8x128xf32>
    %c2 = arith.constant 2 : index
    %c0_15 = arith.constant 0 : index
    %c0_16 = arith.constant 0 : index
    %23 = vector.load %arg2[%c2, %c0_15, %c0_16] : memref<8x128x128xbf16, #tpu.memory_space<vmem>>, vector<1x128x128xbf16>
    %24 = vector.shape_cast %23 : vector<1x128x128xbf16> to vector<128x128xbf16>
    %c2_17 = arith.constant 2 : index
    %c0_18 = arith.constant 0 : index
    %c0_19 = arith.constant 0 : index
    %25 = vector.load %arg3[%c2_17, %c0_18, %c0_19] : memref<8x1x128xbf16, #tpu.memory_space<vmem>>, vector<1x1x128xbf16>
    %26 = vector.shape_cast %25 : vector<1x1x128xbf16> to vector<1x128xbf16>
    %27 = arith.extf %26 : vector<1x128xbf16> to vector<1x128xf32>
    %28 = arith.truncf %22 : vector<8x128xf32> to vector<8x128xbf16>
    %cst_20 = arith.constant dense<0.000000e+00> : vector<8x128xf32>
    %29 = tpu.matmul %28, %24, %cst_20 {dimension_numbers = #tpu.dot_dimension_numbers<[1], [0], [0], [1], [0, 0, 1, 1], [], []>} : vector<8x128xbf16>, vector<128x128xbf16>, vector<8x128xf32> -> vector<8x128xf32>
    %30 = vector.broadcast %27 : vector<1x128xf32> to vector<8x128xf32>
    %31 = arith.addf %29, %30 : vector<8x128xf32>
    %cst_21 = arith.constant 0.000000e+00 : f32
    %32 = vector.broadcast %cst_21 : f32 to vector<8x128xf32>
    %33 = arith.maximumf %31, %32 : vector<8x128xf32>
    %c3 = arith.constant 3 : index
    %c0_22 = arith.constant 0 : index
    %c0_23 = arith.constant 0 : index
    %34 = vector.load %arg2[%c3, %c0_22, %c0_23] : memref<8x128x128xbf16, #tpu.memory_space<vmem>>, vector<1x128x128xbf16>
    %35 = vector.shape_cast %34 : vector<1x128x128xbf16> to vector<128x128xbf16>
    %c3_24 = arith.constant 3 : index
    %c0_25 = arith.constant 0 : index
    %c0_26 = arith.constant 0 : index
    %36 = vector.load %arg3[%c3_24, %c0_25, %c0_26] : memref<8x1x128xbf16, #tpu.memory_space<vmem>>, vector<1x1x128xbf16>
    %37 = vector.shape_cast %36 : vector<1x1x128xbf16> to vector<1x128xbf16>
    %38 = arith.extf %37 : vector<1x128xbf16> to vector<1x128xf32>
    %39 = arith.truncf %33 : vector<8x128xf32> to vector<8x128xbf16>
    %cst_27 = arith.constant dense<0.000000e+00> : vector<8x128xf32>
    %40 = tpu.matmul %39, %35, %cst_27 {dimension_numbers = #tpu.dot_dimension_numbers<[1], [0], [0], [1], [0, 0, 1, 1], [], []>} : vector<8x128xbf16>, vector<128x128xbf16>, vector<8x128xf32> -> vector<8x128xf32>
    %41 = vector.broadcast %38 : vector<1x128xf32> to vector<8x128xf32>
    %42 = arith.addf %40, %41 : vector<8x128xf32>
    %cst_28 = arith.constant 0.000000e+00 : f32
    %43 = vector.broadcast %cst_28 : f32 to vector<8x128xf32>
    %44 = arith.maximumf %42, %43 : vector<8x128xf32>
    %c4 = arith.constant 4 : index
    %c0_29 = arith.constant 0 : index
    %c0_30 = arith.constant 0 : index
    %45 = vector.load %arg2[%c4, %c0_29, %c0_30] : memref<8x128x128xbf16, #tpu.memory_space<vmem>>, vector<1x128x128xbf16>
    %46 = vector.shape_cast %45 : vector<1x128x128xbf16> to vector<128x128xbf16>
    %c4_31 = arith.constant 4 : index
    %c0_32 = arith.constant 0 : index
    %c0_33 = arith.constant 0 : index
    %47 = vector.load %arg3[%c4_31, %c0_32, %c0_33] : memref<8x1x128xbf16, #tpu.memory_space<vmem>>, vector<1x1x128xbf16>
    %48 = vector.shape_cast %47 : vector<1x1x128xbf16> to vector<1x128xbf16>
    %49 = arith.extf %48 : vector<1x128xbf16> to vector<1x128xf32>
    %50 = arith.truncf %44 : vector<8x128xf32> to vector<8x128xbf16>
    %cst_34 = arith.constant dense<0.000000e+00> : vector<8x128xf32>
    %51 = tpu.matmul %50, %46, %cst_34 {dimension_numbers = #tpu.dot_dimension_numbers<[1], [0], [0], [1], [0, 0, 1, 1], [], []>} : vector<8x128xbf16>, vector<128x128xbf16>, vector<8x128xf32> -> vector<8x128xf32>
    %52 = vector.broadcast %49 : vector<1x128xf32> to vector<8x128xf32>
    %53 = arith.addf %51, %52 : vector<8x128xf32>
    %cst_35 = arith.constant 0.000000e+00 : f32
    %54 = vector.broadcast %cst_35 : f32 to vector<8x128xf32>
    %55 = arith.maximumf %53, %54 : vector<8x128xf32>
    %c5 = arith.constant 5 : index
    %c0_36 = arith.constant 0 : index
    %c0_37 = arith.constant 0 : index
    %56 = vector.load %arg2[%c5, %c0_36, %c0_37] : memref<8x128x128xbf16, #tpu.memory_space<vmem>>, vector<1x128x128xbf16>
    %57 = vector.shape_cast %56 : vector<1x128x128xbf16> to vector<128x128xbf16>
    %c5_38 = arith.constant 5 : index
    %c0_39 = arith.constant 0 : index
    %c0_40 = arith.constant 0 : index
    %58 = vector.load %arg3[%c5_38, %c0_39, %c0_40] : memref<8x1x128xbf16, #tpu.memory_space<vmem>>, vector<1x1x128xbf16>
    %59 = vector.shape_cast %58 : vector<1x1x128xbf16> to vector<1x128xbf16>
    %60 = arith.extf %59 : vector<1x128xbf16> to vector<1x128xf32>
    %61 = arith.truncf %55 : vector<8x128xf32> to vector<8x128xbf16>
    %cst_41 = arith.constant dense<0.000000e+00> : vector<8x128xf32>
    %62 = tpu.matmul %61, %57, %cst_41 {dimension_numbers = #tpu.dot_dimension_numbers<[1], [0], [0], [1], [0, 0, 1, 1], [], []>} : vector<8x128xbf16>, vector<128x128xbf16>, vector<8x128xf32> -> vector<8x128xf32>
    %63 = vector.broadcast %60 : vector<1x128xf32> to vector<8x128xf32>
    %64 = arith.addf %62, %63 : vector<8x128xf32>
    %cst_42 = arith.constant 0.000000e+00 : f32
    %65 = vector.broadcast %cst_42 : f32 to vector<8x128xf32>
    %66 = arith.maximumf %64, %65 : vector<8x128xf32>
    %c6 = arith.constant 6 : index
    %c0_43 = arith.constant 0 : index
    %c0_44 = arith.constant 0 : index
    %67 = vector.load %arg2[%c6, %c0_43, %c0_44] : memref<8x128x128xbf16, #tpu.memory_space<vmem>>, vector<1x128x128xbf16>
    %68 = vector.shape_cast %67 : vector<1x128x128xbf16> to vector<128x128xbf16>
    %c6_45 = arith.constant 6 : index
    %c0_46 = arith.constant 0 : index
    %c0_47 = arith.constant 0 : index
    %69 = vector.load %arg3[%c6_45, %c0_46, %c0_47] : memref<8x1x128xbf16, #tpu.memory_space<vmem>>, vector<1x1x128xbf16>
    %70 = vector.shape_cast %69 : vector<1x1x128xbf16> to vector<1x128xbf16>
    %71 = arith.extf %70 : vector<1x128xbf16> to vector<1x128xf32>
    %72 = arith.truncf %66 : vector<8x128xf32> to vector<8x128xbf16>
    %cst_48 = arith.constant dense<0.000000e+00> : vector<8x128xf32>
    %73 = tpu.matmul %72, %68, %cst_48 {dimension_numbers = #tpu.dot_dimension_numbers<[1], [0], [0], [1], [0, 0, 1, 1], [], []>} : vector<8x128xbf16>, vector<128x128xbf16>, vector<8x128xf32> -> vector<8x128xf32>
    %74 = vector.broadcast %71 : vector<1x128xf32> to vector<8x128xf32>
    %75 = arith.addf %73, %74 : vector<8x128xf32>
    %cst_49 = arith.constant 0.000000e+00 : f32
    %76 = vector.broadcast %cst_49 : f32 to vector<8x128xf32>
    %77 = arith.maximumf %75, %76 : vector<8x128xf32>
    %c7 = arith.constant 7 : index
    %c0_50 = arith.constant 0 : index
    %c0_51 = arith.constant 0 : index
    %78 = vector.load %arg2[%c7, %c0_50, %c0_51] : memref<8x128x128xbf16, #tpu.memory_space<vmem>>, vector<1x128x128xbf16>
    %79 = vector.shape_cast %78 : vector<1x128x128xbf16> to vector<128x128xbf16>
    %c7_52 = arith.constant 7 : index
    %c0_53 = arith.constant 0 : index
    %c0_54 = arith.constant 0 : index
    %80 = vector.load %arg3[%c7_52, %c0_53, %c0_54] : memref<8x1x128xbf16, #tpu.memory_space<vmem>>, vector<1x1x128xbf16>
    %81 = vector.shape_cast %80 : vector<1x1x128xbf16> to vector<1x128xbf16>
    %82 = arith.extf %81 : vector<1x128xbf16> to vector<1x128xf32>
    %83 = arith.truncf %77 : vector<8x128xf32> to vector<8x128xbf16>
    %cst_55 = arith.constant dense<0.000000e+00> : vector<8x128xf32>
    %84 = tpu.matmul %83, %79, %cst_55 {dimension_numbers = #tpu.dot_dimension_numbers<[1], [0], [0], [1], [0, 0, 1, 1], [], []>} : vector<8x128xbf16>, vector<128x128xbf16>, vector<8x128xf32> -> vector<8x128xf32>
    %85 = vector.broadcast %82 : vector<1x128xf32> to vector<8x128xf32>
    %86 = arith.addf %84, %85 : vector<8x128xf32>
    %cst_56 = arith.constant 0.000000e+00 : f32
    %87 = vector.broadcast %cst_56 : f32 to vector<8x128xf32>
    %88 = arith.maximumf %86, %87 : vector<8x128xf32>
    %c0_57 = arith.constant 0 : index
    %c0_58 = arith.constant 0 : index
    %89 = vector.load %arg4[%c0_57, %c0_58] : memref<8x128xf32, #tpu.memory_space<vmem>>, vector<8x128xf32>
    tpu.vector_store %arg4[%c0_57, %c0_58], %88 {strides = array<i32>} : memref<8x128xf32, #tpu.memory_space<vmem>>, vector<8x128xf32>,
    return
  }
  func.func @transform_0(%arg0: i32) -> (i32, i32) {
    %c0_i32 = arith.constant 0 : i32
    %c0_i32_0 = arith.constant 0 : i32
    return %arg0, %c0_i32 : i32, i32
  }
  func.func @transform_1(%arg0: i32) -> (i32, i32, i32) {
    %c0_i32 = arith.constant 0 : i32
    %c0_i32_0 = arith.constant 0 : i32
    %c0_i32_1 = arith.constant 0 : i32
    %c0_i32_2 = arith.constant 0 : i32
    return %c0_i32, %c0_i32_0, %c0_i32_1 : i32, i32, i32
  }
  func.func @transform_2(%arg0: i32) -> (i32, i32, i32) {
    %c0_i32 = arith.constant 0 : i32
    %c0_i32_0 = arith.constant 0 : i32
    %c0_i32_1 = arith.constant 0 : i32
    %c0_i32_2 = arith.constant 0 : i32
    return %c0_i32, %c0_i32_0, %c0_i32_1 : i32, i32, i32
  }
  func.func @transform_3(%arg0: i32) -> (i32, i32) {
    %c0_i32 = arith.constant 0 : i32
    %c0_i32_0 = arith.constant 0 : i32
    return %arg0, %c0_i32 : i32, i32
  }
}

module attributes {stable_mosaic.version = 11 : i64} {
  func.func @_mlp_kernel(%arg0: i32, %arg1: memref<8x128xf32, #tpu.memory_space<vmem>>, %arg2: memref<8x128x128xbf16, #tpu.memory_space<vmem>>, %arg3: memref<8x1x128xbf16, #tpu.memory_space<vmem>>, %arg4: memref<8x128xf32, #tpu.memory_space<vmem>>) attributes {dimension_semantics = [#tpu.dimension_semantics<parallel>], iteration_bounds = array<i64: 1>, scalar_prefetch = 0 : i64, scratch_operands = 0 : i64, tpu.core_type = #tpu.core_type<tc>, window_params = [{transform_indices = @transform_0, window_bounds = array<i64: 8, 128>}, {pipeline_mode = #tpu.pipeline_mode<synchronous>, transform_indices = @transform_1, window_bounds = array<i64: 8, 128, 128>}, {pipeline_mode = #tpu.pipeline_mode<synchronous>, transform_indices = @transform_2, window_bounds = array<i64: 8, 1, 128>}, {transform_indices = @transform_3, window_bounds = array<i64: 8, 128>}]} {
    %c0 = arith.constant 0 : index
    %c0_0 = arith.constant 0 : index
    %0 = vector.load %arg1[%c0, %c0_0] : memref<8x128xf32, #tpu.memory_space<vmem>>, vector<8x128xf32>
    %c0_1 = arith.constant 0 : index
    %c0_2 = arith.constant 0 : index
    %c0_3 = arith.constant 0 : index
    %1 = vector.load %arg2[%c0_1, %c0_2, %c0_3] : memref<8x128x128xbf16, #tpu.memory_space<vmem>>, vector<1x128x128xbf16>
    %2 = vector.shape_cast %1 : vector<1x128x128xbf16> to vector<128x128xbf16>
    %c0_4 = arith.constant 0 : index
    %c0_5 = arith.constant 0 : index
    %c0_6 = arith.constant 0 : index
    %3 = vector.load %arg3[%c0_4, %c0_5, %c0_6] : memref<8x1x128xbf16, #tpu.memory_space<vmem>>, vector<1x1x128xbf16>
    %4 = vector.shape_cast %3 : vector<1x1x128xbf16> to vector<1x128xbf16>
    %5 = arith.extf %4 : vector<1x128xbf16> to vector<1x128xf32>
    %6 = arith.truncf %0 : vector<8x128xf32> to vector<8x128xbf16>
    %cst = arith.constant dense<0.000000e+00> : vector<8x128xf32>
    %7 = tpu.matmul %6, %2, %cst {dimension_numbers = #tpu.dot_dimension_numbers<[1], [0], [0], [1], [0, 0, 1, 1], [], []>} : vector<8x128xbf16>, vector<128x128xbf16>, vector<8x128xf32> -> vector<8x128xf32>
    %8 = vector.broadcast %5 : vector<1x128xf32> to vector<8x128xf32>
    %9 = arith.addf %7, %8 : vector<8x128xf32>
    %cst_7 = arith.constant 0.000000e+00 : f32
    %10 = vector.broadcast %cst_7 : f32 to vector<8x128xf32>
    %11 = arith.maximumf %9, %10 : vector<8x128xf32>
    %c1 = arith.constant 1 : index
    %c0_8 = arith.constant 0 : index
    %c0_9 = arith.constant 0 : index
    %12 = vector.load %arg2[%c1, %c0_8, %c0_9] : memref<8x128x128xbf16, #tpu.memory_space<vmem>>, vector<1x128x128xbf16>
    %13 = vector.shape_cast %12 : vector<1x128x128xbf16> to vector<128x128xbf16>
    %c1_10 = arith.constant 1 : index
    %c0_11 = arith.constant 0 : index
    %c0_12 = arith.constant 0 : index
    %14 = vector.load %arg3[%c1_10, %c0_11, %c0_12] : memref<8x1x128xbf16, #tpu.memory_space<vmem>>, vector<1x1x128xbf16>
    %15 = vector.shape_cast %14 : vector<1x1x128xbf16> to vector<1x128xbf16>
    %16 = arith.extf %15 : vector<1x128xbf16> to vector<1x128xf32>
    %17 = arith.truncf %11 : vector<8x128xf32> to vector<8x128xbf16>
    %cst_13 = arith.constant dense<0.000000e+00> : vector<8x128xf32>
    %18 = tpu.matmul %17, %13, %cst_13 {dimension_numbers = #tpu.dot_dimension_numbers<[1], [0], [0], [1], [0, 0, 1, 1], [], []>} : vector<8x128xbf16>, vector<128x128xbf16>, vector<8x128xf32> -> vector<8x128xf32>
    %19 = vector.broadcast %16 : vector<1x128xf32> to vector<8x128xf32>
    %20 = arith.addf %18, %19 : vector<8x128xf32>
    %cst_14 = arith.constant 0.000000e+00 : f32
    %21 = vector.broadcast %cst_14 : f32 to vector<8x128xf32>
    %22 = arith.maximumf %20, %21 : vector<8x128xf32>
    %c2 = arith.constant 2 : index
    %c0_15 = arith.constant 0 : index
    %c0_16 = arith.constant 0 : index
    %23 = vector.load %arg2[%c2, %c0_15, %c0_16] : memref<8x128x128xbf16, #tpu.memory_space<vmem>>, vector<1x128x128xbf16>
    %24 = vector.shape_cast %23 : vector<1x128x128xbf16> to vector<128x128xbf16>
    %c2_17 = arith.constant 2 : index
    %c0_18 = arith.constant 0 : index
    %c0_19 = arith.constant 0 : index
    %25 = vector.load %arg3[%c2_17, %c0_18, %c0_19] : memref<8x1x128xbf16, #tpu.memory_space<vmem>>, vector<1x1x128xbf16>
    %26 = vector.shape_cast %25 : vector<1x1x128xbf16> to vector<1x128xbf16>
    %27 = arith.extf %26 : vector<1x128xbf16> to vector<1x128xf32>
    %28 = arith.truncf %22 : vector<8x128xf32> to vector<8x128xbf16>
    %cst_20 = arith.constant dense<0.000000e+00> : vector<8x128xf32>
    %29 = tpu.matmul %28, %24, %cst_20 {dimension_numbers = #tpu.dot_dimension_numbers<[1], [0], [0], [1], [0, 0, 1, 1], [], []>} : vector<8x128xbf16>, vector<128x128xbf16>, vector<8x128xf32> -> vector<8x128xf32>
    %30 = vector.broadcast %27 : vector<1x128xf32> to vector<8x128xf32>
    %31 = arith.addf %29, %30 : vector<8x128xf32>
    %cst_21 = arith.constant 0.000000e+00 : f32
    %32 = vector.broadcast %cst_21 : f32 to vector<8x128xf32>
    %33 = arith.maximumf %31, %32 : vector<8x128xf32>
    %c3 = arith.constant 3 : index
    %c0_22 = arith.constant 0 : index
    %c0_23 = arith.constant 0 : index
    %34 = vector.load %arg2[%c3, %c0_22, %c0_23] : memref<8x128x128xbf16, #tpu.memory_space<vmem>>, vector<1x128x128xbf16>
    %35 = vector.shape_cast %34 : vector<1x128x128xbf16> to vector<128x128xbf16>
    %c3_24 = arith.constant 3 : index
    %c0_25 = arith.constant 0 : index
    %c0_26 = arith.constant 0 : index
    %36 = vector.load %arg3[%c3_24, %c0_25, %c0_26] : memref<8x1x128xbf16, #tpu.memory_space<vmem>>, vector<1x1x128xbf16>
    %37 = vector.shape_cast %36 : vector<1x1x128xbf16> to vector<1x128xbf16>
    %38 = arith.extf %37 : vector<1x128xbf16> to vector<1x128xf32>
    %39 = arith.truncf %33 : vector<8x128xf32> to vector<8x128xbf16>
    %cst_27 = arith.constant dense<0.000000e+00> : vector<8x128xf32>
    %40 = tpu.matmul %39, %35, %cst_27 {dimension_numbers = #tpu.dot_dimension_numbers<[1], [0], [0], [1], [0, 0, 1, 1], [], []>} : vector<8x128xbf16>, vector<128x128xbf16>, vector<8x128xf32> -> vector<8x128xf32>
    %41 = vector.broadcast %38 : vector<1x128xf32> to vector<8x128xf32>
    %42 = arith.addf %40, %41 : vector<8x128xf32>
    %cst_28 = arith.constant 0.000000e+00 : f32
    %43 = vector.broadcast %cst_28 : f32 to vector<8x128xf32>
    %44 = arith.maximumf %42, %43 : vector<8x128xf32>
    %c4 = arith.constant 4 : index
    %c0_29 = arith.constant 0 : index
    %c0_30 = arith.constant 0 : index
    %45 = vector.load %arg2[%c4, %c0_29, %c0_30] : memref<8x128x128xbf16, #tpu.memory_space<vmem>>, vector<1x128x128xbf16>
    %46 = vector.shape_cast %45 : vector<1x128x128xbf16> to vector<128x128xbf16>
    %c4_31 = arith.constant 4 : index
    %c0_32 = arith.constant 0 : index
    %c0_33 = arith.constant 0 : index
    %47 = vector.load %arg3[%c4_31, %c0_32, %c0_33] : memref<8x1x128xbf16, #tpu.memory_space<vmem>>, vector<1x1x128xbf16>
    %48 = vector.shape_cast %47 : vector<1x1x128xbf16> to vector<1x128xbf16>
    %49 = arith.extf %48 : vector<1x128xbf16> to vector<1x128xf32>
    %50 = arith.truncf %44 : vector<8x128xf32> to vector<8x128xbf16>
    %cst_34 = arith.constant dense<0.000000e+00> : vector<8x128xf32>
    %51 = tpu.matmul %50, %46, %cst_34 {dimension_numbers = #tpu.dot_dimension_numbers<[1], [0], [0], [1], [0, 0, 1, 1], [], []>} : vector<8x128xbf16>, vector<128x128xbf16>, vector<8x128xf32> -> vector<8x128xf32>
    %52 = vector.broadcast %49 : vector<1x128xf32> to vector<8x128xf32>
    %53 = arith.addf %51, %52 : vector<8x128xf32>
    %cst_35 = arith.constant 0.000000e+00 : f32
    %54 = vector.broadcast %cst_35 : f32 to vector<8x128xf32>
    %55 = arith.maximumf %53, %54 : vector<8x128xf32>
    %c5 = arith.constant 5 : index
    %c0_36 = arith.constant 0 : index
    %c0_37 = arith.constant 0 : index
    %56 = vector.load %arg2[%c5, %c0_36, %c0_37] : memref<8x128x128xbf16, #tpu.memory_space<vmem>>, vector<1x128x128xbf16>
    %57 = vector.shape_cast %56 : vector<1x128x128xbf16> to vector<128x128xbf16>
    %c5_38 = arith.constant 5 : index
    %c0_39 = arith.constant 0 : index
    %c0_40 = arith.constant 0 : index
    %58 = vector.load %arg3[%c5_38, %c0_39, %c0_40] : memref<8x1x128xbf16, #tpu.memory_space<vmem>>, vector<1x1x128xbf16>
    %59 = vector.shape_cast %58 : vector<1x1x128xbf16> to vector<1x128xbf16>
    %60 = arith.extf %59 : vector<1x128xbf16> to vector<1x128xf32>
    %61 = arith.truncf %55 : vector<8x128xf32> to vector<8x128xbf16>
    %cst_41 = arith.constant dense<0.000000e+00> : vector<8x128xf32>
    %62 = tpu.matmul %61, %57, %cst_41 {dimension_numbers = #tpu.dot_dimension_numbers<[1], [0], [0], [1], [0, 0, 1, 1], [], []>} : vector<8x128xbf16>, vector<128x128xbf16>, vector<8x128xf32> -> vector<8x128xf32>
    %63 = vector.broadcast %60 : vector<1x128xf32> to vector<8x128xf32>
    %64 = arith.addf %62, %63 : vector<8x128xf32>
    %cst_42 = arith.constant 0.000000e+00 : f32
    %65 = vector.broadcast %cst_42 : f32 to vector<8x128xf32>
    %66 = arith.maximumf %64, %65 : vector<8x128xf32>
    %c6 = arith.constant 6 : index
    %c0_43 = arith.constant 0 : index
    %c0_44 = arith.constant 0 : index
    %67 = vector.load %arg2[%c6, %c0_43, %c0_44] : memref<8x128x128xbf16, #tpu.memory_space<vmem>>, vector<1x128x128xbf16>
    %68 = vector.shape_cast %67 : vector<1x128x128xbf16> to vector<128x128xbf16>
    %c6_45 = arith.constant 6 : index
    %c0_46 = arith.constant 0 : index
    %c0_47 = arith.constant 0 : index
    %69 = vector.load %arg3[%c6_45, %c0_46, %c0_47] : memref<8x1x128xbf16, #tpu.memory_space<vmem>>, vector<1x1x128xbf16>
    %70 = vector.shape_cast %69 : vector<1x1x128xbf16> to vector<1x128xbf16>
    %71 = arith.extf %70 : vector<1x128xbf16> to vector<1x128xf32>
    %72 = arith.truncf %66 : vector<8x128xf32> to vector<8x128xbf16>
    %cst_48 = arith.constant dense<0.000000e+00> : vector<8x128xf32>
    %73 = tpu.matmul %72, %68, %cst_48 {dimension_numbers = #tpu.dot_dimension_numbers<[1], [0], [0], [1], [0, 0, 1, 1], [], []>} : vector<8x128xbf16>, vector<128x128xbf16>, vector<8x128xf32> -> vector<8x128xf32>
    %74 = vector.broadcast %71 : vector<1x128xf32> to vector<8x128xf32>
    %75 = arith.addf %73, %74 : vector<8x128xf32>
    %cst_49 = arith.constant 0.000000e+00 : f32
    %76 = vector.broadcast %cst_49 : f32 to vector<8x128xf32>
    %77 = arith.maximumf %75, %76 : vector<8x128xf32>
    %c7 = arith.constant 7 : index
    %c0_50 = arith.constant 0 : index
    %c0_51 = arith.constant 0 : index
    %78 = vector.load %arg2[%c7, %c0_50, %c0_51] : memref<8x128x128xbf16, #tpu.memory_space<vmem>>, vector<1x128x128xbf16>
    %79 = vector.shape_cast %78 : vector<1x128x128xbf16> to vector<128x128xbf16>
    %c7_52 = arith.constant 7 : index
    %c0_53 = arith.constant 0 : index
    %c0_54 = arith.constant 0 : index
    %80 = vector.load %arg3[%c7_52, %c0_53, %c0_54] : memref<8x1x128xbf16, #tpu.memory_space<vmem>>, vector<1x1x128xbf16>
    %81 = vector.shape_cast %80 : vector<1x1x128xbf16> to vector<1x128xbf16>
    %82 = arith.extf %81 : vector<1x128xbf16> to vector<1x128xf32>
    %83 = arith.truncf %77 : vector<8x128xf32> to vector<8x128xbf16>
    %cst_55 = arith.constant dense<0.000000e+00> : vector<8x128xf32>
    %84 = tpu.matmul %83, %79, %cst_55 {dimension_numbers = #tpu.dot_dimension_numbers<[1], [0], [0], [1], [0, 0, 1, 1], [], []>} : vector<8x128xbf16>, vector<128x128xbf16>, vector<8x128xf32> -> vector<8x128xf32>
    %85 = vector.broadcast %82 : vector<1x128xf32> to vector<8x128xf32>
    %86 = arith.addf %84, %85 : vector<8x128xf32>
    %cst_56 = arith.constant 0.000000e+00 : f32
    %87 = vector.broadcast %cst_56 : f32 to vector<8x128xf32>
    %88 = arith.maximumf %86, %87 : vector<8x128xf32>
    %c0_57 = arith.constant 0 : index
    %c0_58 = arith.constant 0 : index
    %89 = vector.load %arg4[%c0_57, %c0_58] : memref<8x128xf32, #tpu.memory_space<vmem>>, vector<8x128xf32>
    tpu.vector_store %arg4[%c0_57, %c0_58], %88 {strides = array<i32>} : memref<8x128xf32, #tpu.memory_space<vmem>>, vector<8x128xf32>,
    return
  }
  func.func @transform_0(%arg0: i32) -> (i32, i32) {
    %c0_i32 = arith.constant 0 : i32
    %c0_i32_0 = arith.constant 0 : i32
    return %arg0, %c0_i32 : i32, i32
  }
  func.func @transform_1(%arg0: i32) -> (i32, i32, i32) {
    %c0_i32 = arith.constant 0 : i32
    %c0_i32_0 = arith.constant 0 : i32
    %c0_i32_1 = arith.constant 0 : i32
    %c0_i32_2 = arith.constant 0 : i32
    return %c0_i32, %c0_i32_0, %c0_i32_1 : i32, i32, i32
  }
  func.func @transform_2(%arg0: i32) -> (i32, i32, i32) {
    %c0_i32 = arith.constant 0 : i32
    %c0_i32_0 = arith.constant 0 : i32
    %c0_i32_1 = arith.constant 0 : i32
    %c0_i32_2 = arith.constant 0 : i32
    return %c0_i32, %c0_i32_0, %c0_i32_1 : i32, i32, i32
  }
  func.func @transform_3(%arg0: i32) -> (i32, i32) {
    %c0_i32 = arith.constant 0 : i32
    %c0_i32_0 = arith.constant 0 : i32
    return %arg0, %c0_i32 : i32, i32
  }
}

</mosaic_0001>

<llo_original>
// kernel: tpu_custom_call.1
$region0: #{tpu_custom_call.1}
  #allocation0 [shape = 'u32[]', space=smem, size = 0x4, offset = 0x4, fixed_abs, tag = 'smem constant byte address 0x4 - core index']
  #allocation1 [shape = 'u32[144,128]{1,0:T(1,128)}', space=vmem, size = 0x12000, scoped, tag = 'internal scratch']
  %s0 = inlined_call_operand.vmem [shape: f32[8,128], index: 0, kind: input, shape index: {}]
  %s1 = inlined_call_operand.hbm [shape: bf16[8,128,128], index: 1, kind: input, shape index: {}]
  %s2 = inlined_call_operand.vmem [shape: bf16[8,1,128], index: 2, kind: input, shape index: {}]
  %s3 = inlined_call_operand.hbm [shape: f32[8,128], index: 3, kind: output, shape index: {}]
  %s4 = sld [smem:[#allocation0]]
  $region26: #{tpu_custom_call.1} parent=0
    _
  %s6 = ssub.s32 1, %s4
  %s7 = scalar_select 0, %s6, %s4
  $region1: #{tpu_custom_call.1} parent=0
    #allocation2 [shape = 'u8[262144]{0}', space=vmem, size = 0x40000, scoped, tag = 'input window, operand 1, single buffered']
    #allocation3 [shape = 's32[1]{0}', space=sflag, size = 0x4, scoped, tag = 'scoped memory for tpu_custom_call.1']
    #allocation4 [shape = 's32[1]{0}', space=sflag, size = 0x4, scoped, tag = 'scoped memory for tpu_custom_call.1']
    #allocation5 [shape = 'u8[4096]{0}', space=vmem, size = 0x1000, scoped, tag = 'output window, operand 0, single buffered']
    %8 = vsyncpa [#allocation3], 0
    %9 = vsyncpa [#allocation4], 0
    // Predicated region
    $region2: #{tpu_custom_call.1} parent=1 // pred_check
      _
    $region3: #{tpu_custom_call.1} parent=1 // pred_check_branch
      %11 = sbr.rel (0) target = $region5
    $region4: #{tpu_custom_call.1} parent=1 // pred_region
      _
    $region5: #{tpu_custom_call.1} parent=1 // pred_fallthru
      _
    // Predicated region
    $region6: #{tpu_custom_call.1} parent=1 // pred_check
      _
    $region7: #{tpu_custom_call.1} parent=1 // pred_check_branch
      %13 = sbr.rel (0) target = $region9
    $region8: #{tpu_custom_call.1} parent=1 // pred_region
      %s15 = ssub.s32 8192, 8192
      %16 = vsyncadd [#allocation3], %s15
      %s17 = sshll.u32 [#allocation2], 4
      %s18 = int_to_ptr.vmem [resolvable:$true] %s17
      %23 = dma.hbm_to_vmem [thread:$0]  %s1, 8192, %s18, [#allocation3], 64, 64, 4
    $region9: #{tpu_custom_call.1} parent=1 // pred_fallthru
      _
    // Predicated region
    $region10: #{tpu_custom_call.1} parent=1 // pred_check
      _
    $region11: #{tpu_custom_call.1} parent=1 // pred_check_branch
      %25 = sbr.rel (0) target = $region13
    $region12: #{tpu_custom_call.1} parent=1 // pred_region
      _
    $region13: #{tpu_custom_call.1} parent=1 // pred_fallthru
      _
    // Predicated region
    $region14: #{tpu_custom_call.1} parent=1 // pred_check
      _
    $region15: #{tpu_custom_call.1} parent=1 // pred_check_branch
      %27 = sbr.rel (0) target = $region17
    $region16: #{tpu_custom_call.1} parent=1 // pred_region
      %28 = dma.done [#allocation3], 8192
    $region17: #{tpu_custom_call.1} parent=1 // pred_fallthru
      _
    %v30 = vld [vmem:[%s0] sm:$0xff]
    %v31 = vld [vmem:[#allocation2] sm:$0xf]
    %v32 = vld [vmem:[#allocation2 + $0x4] sm:$0xf]
    %v33 = vld [vmem:[#allocation2 + $0x8] sm:$0xf]
    %v34 = vld [vmem:[#allocation2 + $0xc] sm:$0xf]
    %v35 = vld [vmem:[#allocation2 + $0x10] sm:$0xf]
    %v36 = vld [vmem:[#allocation2 + $0x14] sm:$0xf]
    %v37 = vld [vmem:[#allocation2 + $0x18] sm:$0xf]
    %v38 = vld [vmem:[#allocation2 + $0x1c] sm:$0xf]
    %v39 = vld [vmem:[#allocation2 + $0x20] sm:$0xf]
    %v40 = vld [vmem:[#allocation2 + $0x24] sm:$0xf]
    %v41 = vld [vmem:[#allocation2 + $0x28] sm:$0xf]
    %v42 = vld [vmem:[#allocation2 + $0x2c] sm:$0xf]
    %v43 = vld [vmem:[#allocation2 + $0x30] sm:$0xf]
    %v44 = vld [vmem:[#allocation2 + $0x34] sm:$0xf]
    %v45 = vld [vmem:[#allocation2 + $0x38] sm:$0xf]
    %v46 = vld [vmem:[#allocation2 + $0x3c] sm:$0xf]
    %v47 = vld [vmem:[%s2] sm:$0x1]
    %v48 = vunpack.c.l.bf16 %v47
    %v49 = vpack.c.bf16 %v30, %v30
    %v50 = vlaneseq
    %v51 = vshrl.u32 %v50, 7
    %v52 = vsub.s32 0, %v51
    %v53 = vrot.slane %v48, %v52
    %v70 = vunpack.c.l.b16 %v31
    %v71 = vunpack.c.l.b16 %v32
    %v72 = vunpack.c.l.b16 %v33
    %v73 = vunpack.c.l.b16 %v34
    %v74 = vunpack.c.l.b16 %v35
    %v75 = vunpack.c.l.b16 %v36
    %v76 = vunpack.c.l.b16 %v37
    %v77 = vunpack.c.l.b16 %v38
    %v78 = vunpack.c.l.b16 %v39
    %v79 = vunpack.c.l.b16 %v40
    %v80 = vunpack.c.l.b16 %v41
    %v81 = vunpack.c.l.b16 %v42
    %v82 = vunpack.c.l.b16 %v43
    %v83 = vunpack.c.l.b16 %v44
    %v84 = vunpack.c.l.b16 %v45
    %v85 = vunpack.c.l.b16 %v46
    %v86 = vpack.c.b16 %v71, %v70
    %v87 = vpack.c.b16 %v73, %v72
    %v88 = vpack.c.b16 %v75, %v74
    %v89 = vpack.c.b16 %v77, %v76
    %v90 = vpack.c.b16 %v79, %v78
    %v91 = vpack.c.b16 %v81, %v80
    %v92 = vpack.c.b16 %v83, %v82
    %v93 = vpack.c.b16 %v85, %v84
    %102 = vmatprep.subr.bf16.mxu0 0
    %103 = vmatpush1.bf16.msra.mxu0 %v93
    %104 = vmatprep.subr.bf16.mxu0 0
    %105 = vmatpush1.bf16.msra.mxu0 %v92
    %106 = vmatprep.subr.bf16.mxu0 0
    %107 = vmatpush1.bf16.msra.mxu0 %v91
    %108 = vmatprep.subr.bf16.mxu0 0
    %109 = vmatpush1.bf16.msra.mxu0 %v90
    %110 = vmatprep.subr.bf16.mxu0 0
    %111 = vmatpush1.bf16.msra.mxu0 %v89
    %112 = vmatprep.subr.bf16.mxu0 0
    %113 = vmatpush1.bf16.msra.mxu0 %v88
    %114 = vmatprep.subr.bf16.mxu0 0
    %115 = vmatpush1.bf16.msra.mxu0 %v87
    %116 = vmatprep.subr.bf16.mxu0 0
    %117 = vmatpush1.bf16.msra.mxu0 %v86
    %118 = vmatprep.subr.bf16.mxu0 0
    %119 = vmatpush2.bf16.msra.mxu0 0
    %120 = vmatprep.subr.bf16.mxu0 0
    %121 = vmatpush2.bf16.msra.mxu0 0
    %122 = vmatprep.subr.bf16.mxu0 0
    %123 = vmatpush2.bf16.msra.mxu0 0
    %124 = vmatprep.subr.bf16.mxu0 0
    %125 = vmatpush2.bf16.msra.mxu0 0
    %126 = vmatprep.subr.bf16.mxu0 0
    %127 = vmatpush2.bf16.msra.mxu0 0
    %128 = vmatprep.subr.bf16.mxu0 0
    %129 = vmatpush2.bf16.msra.mxu0 0
    %130 = vmatprep.subr.bf16.mxu0 0
    %131 = vmatpush2.bf16.msra.mxu0 0
    %132 = vmatprep.subr.bf16.mxu0 0
    %133 = vmatpush2.bf16.msra.mxu0 0
    %134 = vmatprep.mubr.bf16.mxu0 0
    %135 = vmatmul.mubr.bf16.gmra.mxu0 %v49
    %v136 = vpop.f32.mrf.mxu0
    %v137 = vadd.f32 %v53, %v136
    %v138 = vpop.f32.mrf.mxu0
    %v139 = vpop.f32.mrf.mxu0
    %v140 = vpop.f32.mrf.mxu0
    %141 = vdwg.mxu0
    %v142 = vmax.f32 %v137, 0.0
    %s143 = scalar_lea.vmem [#allocation2], 64
    %v144 = vld [vmem:[%s143] sm:$0xf]
    %v145 = vld [vmem:[%s143 + $0x4] sm:$0xf]
    %v146 = vld [vmem:[%s143 + $0x8] sm:$0xf]
    %v147 = vld [vmem:[%s143 + $0xc] sm:$0xf]
    %v148 = vld [vmem:[%s143 + $0x10] sm:$0xf]
    %v149 = vld [vmem:[%s143 + $0x14] sm:$0xf]
    %v150 = vld [vmem:[%s143 + $0x18] sm:$0xf]
    %v151 = vld [vmem:[%s143 + $0x1c] sm:$0xf]
    %v152 = vld [vmem:[%s143 + $0x20] sm:$0xf]
    %v153 = vld [vmem:[%s143 + $0x24] sm:$0xf]
    %v154 = vld [vmem:[%s143 + $0x28] sm:$0xf]
    %v155 = vld [vmem:[%s143 + $0x2c] sm:$0xf]
    %v156 = vld [vmem:[%s143 + $0x30] sm:$0xf]
    %v157 = vld [vmem:[%s143 + $0x34] sm:$0xf]
    %v158 = vld [vmem:[%s143 + $0x38] sm:$0xf]
    %v159 = vld [vmem:[%s143 + $0x3c] sm:$0xf]
    %s160 = scalar_lea.vmem %s2, 1
    %v161 = vld [vmem:[%s160] sm:$0x1]
    %v162 = vunpack.c.l.bf16 %v161
    %v163 = vpack.c.bf16 %v142, %v142
    %v164 = vlaneseq
    %v165 = vshrl.u32 %v164, 7
    %v166 = vsub.s32 0, %v165
    %v167 = vrot.slane %v162, %v166
    %v184 = vunpack.c.l.b16 %v144
    %v185 = vunpack.c.l.b16 %v145
    %v186 = vunpack.c.l.b16 %v146
    %v187 = vunpack.c.l.b16 %v147
    %v188 = vunpack.c.l.b16 %v148
    %v189 = vunpack.c.l.b16 %v149
    %v190 = vunpack.c.l.b16 %v150
    %v191 = vunpack.c.l.b16 %v151
    %v192 = vunpack.c.l.b16 %v152
    %v193 = vunpack.c.l.b16 %v153
    %v194 = vunpack.c.l.b16 %v154
    %v195 = vunpack.c.l.b16 %v155
    %v196 = vunpack.c.l.b16 %v156
    %v197 = vunpack.c.l.b16 %v157
    %v198 = vunpack.c.l.b16 %v158
    %v199 = vunpack.c.l.b16 %v159
    %v200 = vpack.c.b16 %v185, %v184
    %v201 = vpack.c.b16 %v187, %v186
    %v202 = vpack.c.b16 %v189, %v188
    %v203 = vpack.c.b16 %v191, %v190
    %v204 = vpack.c.b16 %v193, %v192
    %v205 = vpack.c.b16 %v195, %v194
    %v206 = vpack.c.b16 %v197, %v196
    %v207 = vpack.c.b16 %v199, %v198
    %216 = vmatprep.subr.bf16.mxu0 0
    %217 = vmatpush1.bf16.msra.mxu0 %v207
    %218 = vmatprep.subr.bf16.mxu0 0
    %219 = vmatpush1.bf16.msra.mxu0 %v206
    %220 = vmatprep.subr.bf16.mxu0 0
    %221 = vmatpush1.bf16.msra.mxu0 %v205
    %222 = vmatprep.subr.bf16.mxu0 0
    %223 = vmatpush1.bf16.msra.mxu0 %v204
    %224 = vmatprep.subr.bf16.mxu0 0
    %225 = vmatpush1.bf16.msra.mxu0 %v203
    %226 = vmatprep.subr.bf16.mxu0 0
    %227 = vmatpush1.bf16.msra.mxu0 %v202
    %228 = vmatprep.subr.bf16.mxu0 0
    %229 = vmatpush1.bf16.msra.mxu0 %v201
    %230 = vmatprep.subr.bf16.mxu0 0
    %231 = vmatpush1.bf16.msra.mxu0 %v200
    %232 = vmatprep.subr.bf16.mxu0 0
    %233 = vmatpush2.bf16.msra.mxu0 0
    %234 = vmatprep.subr.bf16.mxu0 0
    %235 = vmatpush2.bf16.msra.mxu0 0
    %236 = vmatprep.subr.bf16.mxu0 0
    %237 = vmatpush2.bf16.msra.mxu0 0
    %238 = vmatprep.subr.bf16.mxu0 0
    %239 = vmatpush2.bf16.msra.mxu0 0
    %240 = vmatprep.subr.bf16.mxu0 0
    %241 = vmatpush2.bf16.msra.mxu0 0
    %242 = vmatprep.subr.bf16.mxu0 0
    %243 = vmatpush2.bf16.msra.mxu0 0
    %244 = vmatprep.subr.bf16.mxu0 0
    %245 = vmatpush2.bf16.msra.mxu0 0
    %246 = vmatprep.subr.bf16.mxu0 0
    %247 = vmatpush2.bf16.msra.mxu0 0
    %248 = vmatprep.mubr.bf16.mxu0 0
    %249 = vmatmul.mubr.bf16.gmra.mxu0 %v163
    %v250 = vpop.f32.mrf.mxu0
    %v251 = vadd.f32 %v167, %v250
    %v252 = vpop.f32.mrf.mxu0
    %v253 = vpop.f32.mrf.mxu0
    %v254 = vpop.f32.mrf.mxu0
    %255 = vdwg.mxu0
    %v256 = vmax.f32 %v251, 0.0
    %s257 = scalar_lea.vmem [#allocation2], 128
    %v258 = vld [vmem:[%s257] sm:$0xf]
    %v259 = vld [vmem:[%s257 + $0x4] sm:$0xf]
    %v260 = vld [vmem:[%s257 + $0x8] sm:$0xf]
    %v261 = vld [vmem:[%s257 + $0xc] sm:$0xf]
    %v262 = vld [vmem:[%s257 + $0x10] sm:$0xf]
    %v263 = vld [vmem:[%s257 + $0x14] sm:$0xf]
    %v264 = vld [vmem:[%s257 + $0x18] sm:$0xf]
    %v265 = vld [vmem:[%s257 + $0x1c] sm:$0xf]
    %v266 = vld [vmem:[%s257 + $0x20] sm:$0xf]
    %v267 = vld [vmem:[%s257 + $0x24] sm:$0xf]
    %v268 = vld [vmem:[%s257 + $0x28] sm:$0xf]
    %v269 = vld [vmem:[%s257 + $0x2c] sm:$0xf]
    %v270 = vld [vmem:[%s257 + $0x30] sm:$0xf]
    %v271 = vld [vmem:[%s257 + $0x34] sm:$0xf]
    %v272 = vld [vmem:[%s257 + $0x38] sm:$0xf]
    %v273 = vld [vmem:[%s257 + $0x3c] sm:$0xf]
    %s274 = scalar_lea.vmem %s2, 2
    %v275 = vld [vmem:[%s274] sm:$0x1]
    %v276 = vunpack.c.l.bf16 %v275
    %v277 = vpack.c.bf16 %v256, %v256
    %v278 = vlaneseq
    %v279 = vshrl.u32 %v278, 7
    %v280 = vsub.s32 0, %v279
    %v281 = vrot.slane %v276, %v280
    %v298 = vunpack.c.l.b16 %v258
    %v299 = vunpack.c.l.b16 %v259
    %v300 = vunpack.c.l.b16 %v260
    %v301 = vunpack.c.l.b16 %v261
    %v302 = vunpack.c.l.b16 %v262
    %v303 = vunpack.c.l.b16 %v263
    %v304 = vunpack.c.l.b16 %v264
    %v305 = vunpack.c.l.b16 %v265
    %v306 = vunpack.c.l.b16 %v266
    %v307 = vunpack.c.l.b16 %v267
    %v308 = vunpack.c.l.b16 %v268
    %v309 = vunpack.c.l.b16 %v269
    %v310 = vunpack.c.l.b16 %v270
    %v311 = vunpack.c.l.b16 %v271
    %v312 = vunpack.c.l.b16 %v272
    %v313 = vunpack.c.l.b16 %v273
    %v314 = vpack.c.b16 %v299, %v298
    %v315 = vpack.c.b16 %v301, %v300
    %v316 = vpack.c.b16 %v303, %v302
    %v317 = vpack.c.b16 %v305, %v304
    %v318 = vpack.c.b16 %v307, %v306
    %v319 = vpack.c.b16 %v309, %v308
    %v320 = vpack.c.b16 %v311, %v310
    %v321 = vpack.c.b16 %v313, %v312
    %330 = vmatprep.subr.bf16.mxu0 0
    %331 = vmatpush1.bf16.msra.mxu0 %v321
    %332 = vmatprep.subr.bf16.mxu0 0
    %333 = vmatpush1.bf16.msra.mxu0 %v320
    %334 = vmatprep.subr.bf16.mxu0 0
    %335 = vmatpush1.bf16.msra.mxu0 %v319
    %336 = vmatprep.subr.bf16.mxu0 0
    %337 = vmatpush1.bf16.msra.mxu0 %v318
    %338 = vmatprep.subr.bf16.mxu0 0
    %339 = vmatpush1.bf16.msra.mxu0 %v317
    %340 = vmatprep.subr.bf16.mxu0 0
    %341 = vmatpush1.bf16.msra.mxu0 %v316
    %342 = vmatprep.subr.bf16.mxu0 0
    %343 = vmatpush1.bf16.msra.mxu0 %v315
    %344 = vmatprep.subr.bf16.mxu0 0
    %345 = vmatpush1.bf16.msra.mxu0 %v314
    %346 = vmatprep.subr.bf16.mxu0 0
    %347 = vmatpush2.bf16.msra.mxu0 0
    %348 = vmatprep.subr.bf16.mxu0 0
    %349 = vmatpush2.bf16.msra.mxu0 0
    %350 = vmatprep.subr.bf16.mxu0 0
    %351 = vmatpush2.bf16.msra.mxu0 0
    %352 = vmatprep.subr.bf16.mxu0 0
    %353 = vmatpush2.bf16.msra.mxu0 0
    %354 = vmatprep.subr.bf16.mxu0 0
    %355 = vmatpush2.bf16.msra.mxu0 0
    %356 = vmatprep.subr.bf16.mxu0 0
    %357 = vmatpush2.bf16.msra.mxu0 0
    %358 = vmatprep.subr.bf16.mxu0 0
    %359 = vmatpush2.bf16.msra.mxu0 0
    %360 = vmatprep.subr.bf16.mxu0 0
    %361 = vmatpush2.bf16.msra.mxu0 0
    %362 = vmatprep.mubr.bf16.mxu0 0
    %363 = vmatmul.mubr.bf16.gmra.mxu0 %v277
    %v364 = vpop.f32.mrf.mxu0
    %v365 = vadd.f32 %v281, %v364
    %v366 = vpop.f32.mrf.mxu0
    %v367 = vpop.f32.mrf.mxu0
    %v368 = vpop.f32.mrf.mxu0
    %369 = vdwg.mxu0
    %v370 = vmax.f32 %v365, 0.0
    %s371 = scalar_lea.vmem [#allocation2], 192
    %v372 = vld [vmem:[%s371] sm:$0xf]
    %v373 = vld [vmem:[%s371 + $0x4] sm:$0xf]
    %v374 = vld [vmem:[%s371 + $0x8] sm:$0xf]
    %v375 = vld [vmem:[%s371 + $0xc] sm:$0xf]
    %v376 = vld [vmem:[%s371 + $0x10] sm:$0xf]
    %v377 = vld [vmem:[%s371 + $0x14] sm:$0xf]
    %v378 = vld [vmem:[%s371 + $0x18] sm:$0xf]
    %v379 = vld [vmem:[%s371 + $0x1c] sm:$0xf]
    %v380 = vld [vmem:[%s371 + $0x20] sm:$0xf]
    %v381 = vld [vmem:[%s371 + $0x24] sm:$0xf]
    %v382 = vld [vmem:[%s371 + $0x28] sm:$0xf]
    %v383 = vld [vmem:[%s371 + $0x2c] sm:$0xf]
    %v384 = vld [vmem:[%s371 + $0x30] sm:$0xf]
    %v385 = vld [vmem:[%s371 + $0x34] sm:$0xf]
    %v386 = vld [vmem:[%s371 + $0x38] sm:$0xf]
    %v387 = vld [vmem:[%s371 + $0x3c] sm:$0xf]
    %s388 = scalar_lea.vmem %s2, 3
    %v389 = vld [vmem:[%s388] sm:$0x1]
    %v390 = vunpack.c.l.bf16 %v389
    %v391 = vpack.c.bf16 %v370, %v370
    %v392 = vlaneseq
    %v393 = vshrl.u32 %v392, 7
    %v394 = vsub.s32 0, %v393
    %v395 = vrot.slane %v390, %v394
    %v412 = vunpack.c.l.b16 %v372
    %v413 = vunpack.c.l.b16 %v373
    %v414 = vunpack.c.l.b16 %v374
    %v415 = vunpack.c.l.b16 %v375
    %v416 = vunpack.c.l.b16 %v376
    %v417 = vunpack.c.l.b16 %v377
    %v418 = vunpack.c.l.b16 %v378
    %v419 = vunpack.c.l.b16 %v379
    %v420 = vunpack.c.l.b16 %v380
    %v421 = vunpack.c.l.b16 %v381
    %v422 = vunpack.c.l.b16 %v382
    %v423 = vunpack.c.l.b16 %v383
    %v424 = vunpack.c.l.b16 %v384
    %v425 = vunpack.c.l.b16 %v385
    %v426 = vunpack.c.l.b16 %v386
    %v427 = vunpack.c.l.b16 %v387
    %v428 = vpack.c.b16 %v413, %v412
    %v429 = vpack.c.b16 %v415, %v414
    %v430 = vpack.c.b16 %v417, %v416
    %v431 = vpack.c.b16 %v419, %v418
    %v432 = vpack.c.b16 %v421, %v420
    %v433 = vpack.c.b16 %v423, %v422
    %v434 = vpack.c.b16 %v425, %v424
    %v435 = vpack.c.b16 %v427, %v426
    %444 = vmatprep.subr.bf16.mxu0 0
    %445 = vmatpush1.bf16.msra.mxu0 %v435
    %446 = vmatprep.subr.bf16.mxu0 0
    %447 = vmatpush1.bf16.msra.mxu0 %v434
    %448 = vmatprep.subr.bf16.mxu0 0
    %449 = vmatpush1.bf16.msra.mxu0 %v433
    %450 = vmatprep.subr.bf16.mxu0 0
    %451 = vmatpush1.bf16.msra.mxu0 %v432
    %452 = vmatprep.subr.bf16.mxu0 0
    %453 = vmatpush1.bf16.msra.mxu0 %v431
    %454 = vmatprep.subr.bf16.mxu0 0
    %455 = vmatpush1.bf16.msra.mxu0 %v430
    %456 = vmatprep.subr.bf16.mxu0 0
    %457 = vmatpush1.bf16.msra.mxu0 %v429
    %458 = vmatprep.subr.bf16.mxu0 0
    %459 = vmatpush1.bf16.msra.mxu0 %v428
    %460 = vmatprep.subr.bf16.mxu0 0
    %461 = vmatpush2.bf16.msra.mxu0 0
    %462 = vmatprep.subr.bf16.mxu0 0
    %463 = vmatpush2.bf16.msra.mxu0 0
    %464 = vmatprep.subr.bf16.mxu0 0
    %465 = vmatpush2.bf16.msra.mxu0 0
    %466 = vmatprep.subr.bf16.mxu0 0
    %467 = vmatpush2.bf16.msra.mxu0 0
    %468 = vmatprep.subr.bf16.mxu0 0
    %469 = vmatpush2.bf16.msra.mxu0 0
    %470 = vmatprep.subr.bf16.mxu0 0
    %471 = vmatpush2.bf16.msra.mxu0 0
    %472 = vmatprep.subr.bf16.mxu0 0
    %473 = vmatpush2.bf16.msra.mxu0 0
    %474 = vmatprep.subr.bf16.mxu0 0
    %475 = vmatpush2.bf16.msra.mxu0 0
    %476 = vmatprep.mubr.bf16.mxu0 0
    %477 = vmatmul.mubr.bf16.gmra.mxu0 %v391
    %v478 = vpop.f32.mrf.mxu0
    %v479 = vadd.f32 %v395, %v478
    %v480 = vpop.f32.mrf.mxu0
    %v481 = vpop.f32.mrf.mxu0
    %v482 = vpop.f32.mrf.mxu0
    %483 = vdwg.mxu0
    %v484 = vmax.f32 %v479, 0.0
    %s485 = scalar_lea.vmem [#allocation2], 256
    %v486 = vld [vmem:[%s485] sm:$0xf]
    %v487 = vld [vmem:[%s485 + $0x4] sm:$0xf]
    %v488 = vld [vmem:[%s485 + $0x8] sm:$0xf]
    %v489 = vld [vmem:[%s485 + $0xc] sm:$0xf]
    %v490 = vld [vmem:[%s485 + $0x10] sm:$0xf]
    %v491 = vld [vmem:[%s485 + $0x14] sm:$0xf]
    %v492 = vld [vmem:[%s485 + $0x18] sm:$0xf]
    %v493 = vld [vmem:[%s485 + $0x1c] sm:$0xf]
    %v494 = vld [vmem:[%s485 + $0x20] sm:$0xf]
    %v495 = vld [vmem:[%s485 + $0x24] sm:$0xf]
    %v496 = vld [vmem:[%s485 + $0x28] sm:$0xf]
    %v497 = vld [vmem:[%s485 + $0x2c] sm:$0xf]
    %v498 = vld [vmem:[%s485 + $0x30] sm:$0xf]
    %v499 = vld [vmem:[%s485 + $0x34] sm:$0xf]
    %v500 = vld [vmem:[%s485 + $0x38] sm:$0xf]
    %v501 = vld [vmem:[%s485 + $0x3c] sm:$0xf]
    %s502 = scalar_lea.vmem %s2, 4
    %v503 = vld [vmem:[%s502] sm:$0x1]
    %v504 = vunpack.c.l.bf16 %v503
    %v505 = vpack.c.bf16 %v484, %v484
    %v506 = vlaneseq
    %v507 = vshrl.u32 %v506, 7
    %v508 = vsub.s32 0, %v507
    %v509 = vrot.slane %v504, %v508
    %v526 = vunpack.c.l.b16 %v486
    %v527 = vunpack.c.l.b16 %v487
    %v528 = vunpack.c.l.b16 %v488
    %v529 = vunpack.c.l.b16 %v489
    %v530 = vunpack.c.l.b16 %v490
    %v531 = vunpack.c.l.b16 %v491
    %v532 = vunpack.c.l.b16 %v492
    %v533 = vunpack.c.l.b16 %v493
    %v534 = vunpack.c.l.b16 %v494
    %v535 = vunpack.c.l.b16 %v495
    %v536 = vunpack.c.l.b16 %v496
    %v537 = vunpack.c.l.b16 %v497
    %v538 = vunpack.c.l.b16 %v498
    %v539 = vunpack.c.l.b16 %v499
    %v540 = vunpack.c.l.b16 %v500
    %v541 = vunpack.c.l.b16 %v501
    %v542 = vpack.c.b16 %v527, %v526
    %v543 = vpack.c.b16 %v529, %v528
    %v544 = vpack.c.b16 %v531, %v530
    %v545 = vpack.c.b16 %v533, %v532
    %v546 = vpack.c.b16 %v535, %v534
    %v547 = vpack.c.b16 %v537, %v536
    %v548 = vpack.c.b16 %v539, %v538
    %v549 = vpack.c.b16 %v541, %v540
    %558 = vmatprep.subr.bf16.mxu0 0
    %559 = vmatpush1.bf16.msra.mxu0 %v549
    %560 = vmatprep.subr.bf16.mxu0 0
    %561 = vmatpush1.bf16.msra.mxu0 %v548
    %562 = vmatprep.subr.bf16.mxu0 0
    %563 = vmatpush1.bf16.msra.mxu0 %v547
    %564 = vmatprep.subr.bf16.mxu0 0
    %565 = vmatpush1.bf16.msra.mxu0 %v546
    %566 = vmatprep.subr.bf16.mxu0 0
    %567 = vmatpush1.bf16.msra.mxu0 %v545
    %568 = vmatprep.subr.bf16.mxu0 0
    %569 = vmatpush1.bf16.msra.mxu0 %v544
    %570 = vmatprep.subr.bf16.mxu0 0
    %571 = vmatpush1.bf16.msra.mxu0 %v543
    %572 = vmatprep.subr.bf16.mxu0 0
    %573 = vmatpush1.bf16.msra.mxu0 %v542
    %574 = vmatprep.subr.bf16.mxu0 0
    %575 = vmatpush2.bf16.msra.mxu0 0
    %576 = vmatprep.subr.bf16.mxu0 0
    %577 = vmatpush2.bf16.msra.mxu0 0
    %578 = vmatprep.subr.bf16.mxu0 0
    %579 = vmatpush2.bf16.msra.mxu0 0
    %580 = vmatprep.subr.bf16.mxu0 0
    %581 = vmatpush2.bf16.msra.mxu0 0
    %582 = vmatprep.subr.bf16.mxu0 0
    %583 = vmatpush2.bf16.msra.mxu0 0
    %584 = vmatprep.subr.bf16.mxu0 0
    %585 = vmatpush2.bf16.msra.mxu0 0
    %586 = vmatprep.subr.bf16.mxu0 0
    %587 = vmatpush2.bf16.msra.mxu0 0
    %588 = vmatprep.subr.bf16.mxu0 0
    %589 = vmatpush2.bf16.msra.mxu0 0
    %590 = vmatprep.mubr.bf16.mxu0 0
    %591 = vmatmul.mubr.bf16.gmra.mxu0 %v505
    %v592 = vpop.f32.mrf.mxu0
    %v593 = vadd.f32 %v509, %v592
    %v594 = vpop.f32.mrf.mxu0
    %v595 = vpop.f32.mrf.mxu0
    %v596 = vpop.f32.mrf.mxu0
    %597 = vdwg.mxu0
    %v598 = vmax.f32 %v593, 0.0
    %s599 = scalar_lea.vmem [#allocation2], 320
    %v600 = vld [vmem:[%s599] sm:$0xf]
    %v601 = vld [vmem:[%s599 + $0x4] sm:$0xf]
    %v602 = vld [vmem:[%s599 + $0x8] sm:$0xf]
    %v603 = vld [vmem:[%s599 + $0xc] sm:$0xf]
    %v604 = vld [vmem:[%s599 + $0x10] sm:$0xf]
    %v605 = vld [vmem:[%s599 + $0x14] sm:$0xf]
    %v606 = vld [vmem:[%s599 + $0x18] sm:$0xf]
    %v607 = vld [vmem:[%s599 + $0x1c] sm:$0xf]
    %v608 = vld [vmem:[%s599 + $0x20] sm:$0xf]
    %v609 = vld [vmem:[%s599 + $0x24] sm:$0xf]
    %v610 = vld [vmem:[%s599 + $0x28] sm:$0xf]
    %v611 = vld [vmem:[%s599 + $0x2c] sm:$0xf]
    %v612 = vld [vmem:[%s599 + $0x30] sm:$0xf]
    %v613 = vld [vmem:[%s599 + $0x34] sm:$0xf]
    %v614 = vld [vmem:[%s599 + $0x38] sm:$0xf]
    %v615 = vld [vmem:[%s599 + $0x3c] sm:$0xf]
    %s616 = scalar_lea.vmem %s2, 5
    %v617 = vld [vmem:[%s616] sm:$0x1]
    %v618 = vunpack.c.l.bf16 %v617
    %v619 = vpack.c.bf16 %v598, %v598
    %v620 = vlaneseq
    %v621 = vshrl.u32 %v620, 7
    %v622 = vsub.s32 0, %v621
    %v623 = vrot.slane %v618, %v622
    %v640 = vunpack.c.l.b16 %v600
    %v641 = vunpack.c.l.b16 %v601
    %v642 = vunpack.c.l.b16 %v602
    %v643 = vunpack.c.l.b16 %v603
    %v644 = vunpack.c.l.b16 %v604
    %v645 = vunpack.c.l.b16 %v605
    %v646 = vunpack.c.l.b16 %v606
    %v647 = vunpack.c.l.b16 %v607
    %v648 = vunpack.c.l.b16 %v608
    %v649 = vunpack.c.l.b16 %v609
    %v650 = vunpack.c.l.b16 %v610
    %v651 = vunpack.c.l.b16 %v611
    %v652 = vunpack.c.l.b16 %v612
    %v653 = vunpack.c.l.b16 %v613
    %v654 = vunpack.c.l.b16 %v614
    %v655 = vunpack.c.l.b16 %v615
    %v656 = vpack.c.b16 %v641, %v640
    %v657 = vpack.c.b16 %v643, %v642
    %v658 = vpack.c.b16 %v645, %v644
    %v659 = vpack.c.b16 %v647, %v646
    %v660 = vpack.c.b16 %v649, %v648
    %v661 = vpack.c.b16 %v651, %v650
    %v662 = vpack.c.b16 %v653, %v652
    %v663 = vpack.c.b16 %v655, %v654
    %672 = vmatprep.subr.bf16.mxu0 0
    %673 = vmatpush1.bf16.msra.mxu0 %v663
    %674 = vmatprep.subr.bf16.mxu0 0
    %675 = vmatpush1.bf16.msra.mxu0 %v662
    %676 = vmatprep.subr.bf16.mxu0 0
    %677 = vmatpush1.bf16.msra.mxu0 %v661
    %678 = vmatprep.subr.bf16.mxu0 0
    %679 = vmatpush1.bf16.msra.mxu0 %v660
    %680 = vmatprep.subr.bf16.mxu0 0
    %681 = vmatpush1.bf16.msra.mxu0 %v659
    %682 = vmatprep.subr.bf16.mxu0 0
    %683 = vmatpush1.bf16.msra.mxu0 %v658
    %684 = vmatprep.subr.bf16.mxu0 0
    %685 = vmatpush1.bf16.msra.mxu0 %v657
    %686 = vmatprep.subr.bf16.mxu0 0
    %687 = vmatpush1.bf16.msra.mxu0 %v656
    %688 = vmatprep.subr.bf16.mxu0 0
    %689 = vmatpush2.bf16.msra.mxu0 0
    %690 = vmatprep.subr.bf16.mxu0 0
    %691 = vmatpush2.bf16.msra.mxu0 0
    %692 = vmatprep.subr.bf16.mxu0 0
    %693 = vmatpush2.bf16.msra.mxu0 0
    %694 = vmatprep.subr.bf16.mxu0 0
    %695 = vmatpush2.bf16.msra.mxu0 0
    %696 = vmatprep.subr.bf16.mxu0 0
    %697 = vmatpush2.bf16.msra.mxu0 0
    %698 = vmatprep.subr.bf16.mxu0 0
    %699 = vmatpush2.bf16.msra.mxu0 0
    %700 = vmatprep.subr.bf16.mxu0 0
    %701 = vmatpush2.bf16.msra.mxu0 0
    %702 = vmatprep.subr.bf16.mxu0 0
    %703 = vmatpush2.bf16.msra.mxu0 0
    %704 = vmatprep.mubr.bf16.mxu0 0
    %705 = vmatmul.mubr.bf16.gmra.mxu0 %v619
    %v706 = vpop.f32.mrf.mxu0
    %v707 = vadd.f32 %v623, %v706
    %v708 = vpop.f32.mrf.mxu0
    %v709 = vpop.f32.mrf.mxu0
    %v710 = vpop.f32.mrf.mxu0
    %711 = vdwg.mxu0
    %v712 = vmax.f32 %v707, 0.0
    %s713 = scalar_lea.vmem [#allocation2], 384
    %v714 = vld [vmem:[%s713] sm:$0xf]
    %v715 = vld [vmem:[%s713 + $0x4] sm:$0xf]
    %v716 = vld [vmem:[%s713 + $0x8] sm:$0xf]
    %v717 = vld [vmem:[%s713 + $0xc] sm:$0xf]
    %v718 = vld [vmem:[%s713 + $0x10] sm:$0xf]
    %v719 = vld [vmem:[%s713 + $0x14] sm:$0xf]
    %v720 = vld [vmem:[%s713 + $0x18] sm:$0xf]
    %v721 = vld [vmem:[%s713 + $0x1c] sm:$0xf]
    %v722 = vld [vmem:[%s713 + $0x20] sm:$0xf]
    %v723 = vld [vmem:[%s713 + $0x24] sm:$0xf]
    %v724 = vld [vmem:[%s713 + $0x28] sm:$0xf]
    %v725 = vld [vmem:[%s713 + $0x2c] sm:$0xf]
    %v726 = vld [vmem:[%s713 + $0x30] sm:$0xf]
    %v727 = vld [vmem:[%s713 + $0x34] sm:$0xf]
    %v728 = vld [vmem:[%s713 + $0x38] sm:$0xf]
    %v729 = vld [vmem:[%s713 + $0x3c] sm:$0xf]
    %s730 = scalar_lea.vmem %s2, 6
    %v731 = vld [vmem:[%s730] sm:$0x1]
    %v732 = vunpack.c.l.bf16 %v731
    %v733 = vpack.c.bf16 %v712, %v712
    %v734 = vlaneseq
    %v735 = vshrl.u32 %v734, 7
    %v736 = vsub.s32 0, %v735
    %v737 = vrot.slane %v732, %v736
    %v754 = vunpack.c.l.b16 %v714
    %v755 = vunpack.c.l.b16 %v715
    %v756 = vunpack.c.l.b16 %v716
    %v757 = vunpack.c.l.b16 %v717
    %v758 = vunpack.c.l.b16 %v718
    %v759 = vunpack.c.l.b16 %v719
    %v760 = vunpack.c.l.b16 %v720
    %v761 = vunpack.c.l.b16 %v721
    %v762 = vunpack.c.l.b16 %v722
    %v763 = vunpack.c.l.b16 %v723
    %v764 = vunpack.c.l.b16 %v724
    %v765 = vunpack.c.l.b16 %v725
    %v766 = vunpack.c.l.b16 %v726
    %v767 = vunpack.c.l.b16 %v727
    %v768 = vunpack.c.l.b16 %v728
    %v769 = vunpack.c.l.b16 %v729
    %v770 = vpack.c.b16 %v755, %v754
    %v771 = vpack.c.b16 %v757, %v756
    %v772 = vpack.c.b16 %v759, %v758
    %v773 = vpack.c.b16 %v761, %v760
    %v774 = vpack.c.b16 %v763, %v762
    %v775 = vpack.c.b16 %v765, %v764
    %v776 = vpack.c.b16 %v767, %v766
    %v777 = vpack.c.b16 %v769, %v768
    %786 = vmatprep.subr.bf16.mxu0 0
    %787 = vmatpush1.bf16.msra.mxu0 %v777
    %788 = vmatprep.subr.bf16.mxu0 0
    %789 = vmatpush1.bf16.msra.mxu0 %v776
    %790 = vmatprep.subr.bf16.mxu0 0
    %791 = vmatpush1.bf16.msra.mxu0 %v775
    %792 = vmatprep.subr.bf16.mxu0 0
    %793 = vmatpush1.bf16.msra.mxu0 %v774
    %794 = vmatprep.subr.bf16.mxu0 0
    %795 = vmatpush1.bf16.msra.mxu0 %v773
    %796 = vmatprep.subr.bf16.mxu0 0
    %797 = vmatpush1.bf16.msra.mxu0 %v772
    %798 = vmatprep.subr.bf16.mxu0 0
    %799 = vmatpush1.bf16.msra.mxu0 %v771
    %800 = vmatprep.subr.bf16.mxu0 0
    %801 = vmatpush1.bf16.msra.mxu0 %v770
    %802 = vmatprep.subr.bf16.mxu0 0
    %803 = vmatpush2.bf16.msra.mxu0 0
    %804 = vmatprep.subr.bf16.mxu0 0
    %805 = vmatpush2.bf16.msra.mxu0 0
    %806 = vmatprep.subr.bf16.mxu0 0
    %807 = vmatpush2.bf16.msra.mxu0 0
    %808 = vmatprep.subr.bf16.mxu0 0
    %809 = vmatpush2.bf16.msra.mxu0 0
    %810 = vmatprep.subr.bf16.mxu0 0
    %811 = vmatpush2.bf16.msra.mxu0 0
    %812 = vmatprep.subr.bf16.mxu0 0
    %813 = vmatpush2.bf16.msra.mxu0 0
    %814 = vmatprep.subr.bf16.mxu0 0
    %815 = vmatpush2.bf16.msra.mxu0 0
    %816 = vmatprep.subr.bf16.mxu0 0
    %817 = vmatpush2.bf16.msra.mxu0 0
    %818 = vmatprep.mubr.bf16.mxu0 0
    %819 = vmatmul.mubr.bf16.gmra.mxu0 %v733
    %v820 = vpop.f32.mrf.mxu0
    %v821 = vadd.f32 %v737, %v820
    %v822 = vpop.f32.mrf.mxu0
    %v823 = vpop.f32.mrf.mxu0
    %v824 = vpop.f32.mrf.mxu0
    %825 = vdwg.mxu0
    %v826 = vmax.f32 %v821, 0.0
    %s827 = scalar_lea.vmem [#allocation2], 448
    %v828 = vld [vmem:[%s827] sm:$0xf]
    %v829 = vld [vmem:[%s827 + $0x4] sm:$0xf]
    %v830 = vld [vmem:[%s827 + $0x8] sm:$0xf]
    %v831 = vld [vmem:[%s827 + $0xc] sm:$0xf]
    %v832 = vld [vmem:[%s827 + $0x10] sm:$0xf]
    %v833 = vld [vmem:[%s827 + $0x14] sm:$0xf]
    %v834 = vld [vmem:[%s827 + $0x18] sm:$0xf]
    %v835 = vld [vmem:[%s827 + $0x1c] sm:$0xf]
    %v836 = vld [vmem:[%s827 + $0x20] sm:$0xf]
    %v837 = vld [vmem:[%s827 + $0x24] sm:$0xf]
    %v838 = vld [vmem:[%s827 + $0x28] sm:$0xf]
    %v839 = vld [vmem:[%s827 + $0x2c] sm:$0xf]
    %v840 = vld [vmem:[%s827 + $0x30] sm:$0xf]
    %v841 = vld [vmem:[%s827 + $0x34] sm:$0xf]
    %v842 = vld [vmem:[%s827 + $0x38] sm:$0xf]
    %v843 = vld [vmem:[%s827 + $0x3c] sm:$0xf]
    %s844 = scalar_lea.vmem %s2, 7
    %v845 = vld [vmem:[%s844] sm:$0x1]
    %v846 = vunpack.c.l.bf16 %v845
    %v847 = vpack.c.bf16 %v826, %v826
    %v848 = vlaneseq
    %v849 = vshrl.u32 %v848, 7
    %v850 = vsub.s32 0, %v849
    %v851 = vrot.slane %v846, %v850
    %v868 = vunpack.c.l.b16 %v828
    %v869 = vunpack.c.l.b16 %v829
    %v870 = vunpack.c.l.b16 %v830
    %v871 = vunpack.c.l.b16 %v831
    %v872 = vunpack.c.l.b16 %v832
    %v873 = vunpack.c.l.b16 %v833
    %v874 = vunpack.c.l.b16 %v834
    %v875 = vunpack.c.l.b16 %v835
    %v876 = vunpack.c.l.b16 %v836
    %v877 = vunpack.c.l.b16 %v837
    %v878 = vunpack.c.l.b16 %v838
    %v879 = vunpack.c.l.b16 %v839
    %v880 = vunpack.c.l.b16 %v840
    %v881 = vunpack.c.l.b16 %v841
    %v882 = vunpack.c.l.b16 %v842
    %v883 = vunpack.c.l.b16 %v843
    %v884 = vpack.c.b16 %v869, %v868
    %v885 = vpack.c.b16 %v871, %v870
    %v886 = vpack.c.b16 %v873, %v872
    %v887 = vpack.c.b16 %v875, %v874
    %v888 = vpack.c.b16 %v877, %v876
    %v889 = vpack.c.b16 %v879, %v878
    %v890 = vpack.c.b16 %v881, %v880
    %v891 = vpack.c.b16 %v883, %v882
    %900 = vmatprep.subr.bf16.mxu0 0
    %901 = vmatpush1.bf16.msra.mxu0 %v891
    %902 = vmatprep.subr.bf16.mxu0 0
    %903 = vmatpush1.bf16.msra.mxu0 %v890
    %904 = vmatprep.subr.bf16.mxu0 0
    %905 = vmatpush1.bf16.msra.mxu0 %v889
    %906 = vmatprep.subr.bf16.mxu0 0
    %907 = vmatpush1.bf16.msra.mxu0 %v888
    %908 = vmatprep.subr.bf16.mxu0 0
    %909 = vmatpush1.bf16.msra.mxu0 %v887
    %910 = vmatprep.subr.bf16.mxu0 0
    %911 = vmatpush1.bf16.msra.mxu0 %v886
    %912 = vmatprep.subr.bf16.mxu0 0
    %913 = vmatpush1.bf16.msra.mxu0 %v885
    %914 = vmatprep.subr.bf16.mxu0 0
    %915 = vmatpush1.bf16.msra.mxu0 %v884
    %916 = vmatprep.subr.bf16.mxu0 0
    %917 = vmatpush2.bf16.msra.mxu0 0
    %918 = vmatprep.subr.bf16.mxu0 0
    %919 = vmatpush2.bf16.msra.mxu0 0
    %920 = vmatprep.subr.bf16.mxu0 0
    %921 = vmatpush2.bf16.msra.mxu0 0
    %922 = vmatprep.subr.bf16.mxu0 0
    %923 = vmatpush2.bf16.msra.mxu0 0
    %924 = vmatprep.subr.bf16.mxu0 0
    %925 = vmatpush2.bf16.msra.mxu0 0
    %926 = vmatprep.subr.bf16.mxu0 0
    %927 = vmatpush2.bf16.msra.mxu0 0
    %928 = vmatprep.subr.bf16.mxu0 0
    %929 = vmatpush2.bf16.msra.mxu0 0
    %930 = vmatprep.subr.bf16.mxu0 0
    %931 = vmatpush2.bf16.msra.mxu0 0
    %932 = vmatprep.mubr.bf16.mxu0 0
    %933 = vmatmul.mubr.bf16.gmra.mxu0 %v847
    %v934 = vpop.f32.mrf.mxu0
    %v935 = vadd.f32 %v851, %v934
    %v936 = vpop.f32.mrf.mxu0
    %v937 = vpop.f32.mrf.mxu0
    %v938 = vpop.f32.mrf.mxu0
    %939 = vdwg.mxu0
    %v940 = vmax.f32 %v935, 0.0
    %941 = vst [vmem:[#allocation5] sm:$0xff] %v940
    // Predicated region
    $region18: #{tpu_custom_call.1} parent=1 // pred_check
      _
    $region19: #{tpu_custom_call.1} parent=1 // pred_check_branch
      %943 = sbr.rel (0) target = $region21
    $region20: #{tpu_custom_call.1} parent=1 // pred_region
      %s945 = ssub.s32 128, 128
      %946 = vsyncadd [#allocation4], %s945
      %s948 = sshll.u32 [#allocation5], 4
      %s949 = int_to_ptr.vmem [resolvable:$true] %s948
      %951 = dma.vmem_to_hbm [thread:$0]  %s949, 128, %s3, [#allocation4]
    $region21: #{tpu_custom_call.1} parent=1 // pred_fallthru
      _
    // Predicated region
    $region22: #{tpu_custom_call.1} parent=1 // pred_check
      _
    $region23: #{tpu_custom_call.1} parent=1 // pred_check_branch
      %953 = sbr.rel (0) target = $region25
    $region24: #{tpu_custom_call.1} parent=1 // pred_region
      %954 = dma.done [#allocation4], 128
    $region25: #{tpu_custom_call.1} parent=1 // pred_fallthru
      _
    %955 = vsyncpa [#allocation3], 1
    %956 = vsyncpa [#allocation4], 1

// kernel: tpu_custom_call.1
$region0: #{tpu_custom_call.1}
  #allocation0 [shape = 'u32[]', space=smem, size = 0x4, offset = 0x4, fixed_abs, tag = 'smem constant byte address 0x4 - core index']
  #allocation1 [shape = 'u32[144,128]{1,0:T(1,128)}', space=vmem, size = 0x12000, scoped, tag = 'internal scratch']
  %s0 = inlined_call_operand.vmem [shape: f32[8,128], index: 0, kind: input, shape index: {}]
  %s1 = inlined_call_operand.hbm [shape: bf16[8,128,128], index: 1, kind: input, shape index: {}]
  %s2 = inlined_call_operand.vmem [shape: bf16[8,1,128], index: 2, kind: input, shape index: {}]
  %s3 = inlined_call_operand.hbm [shape: f32[8,128], index: 3, kind: output, shape index: {}]
  %s4 = sld [smem:[#allocation0]]
  $region26: #{tpu_custom_call.1} parent=0
    _
  %s6 = ssub.s32 1, %s4
  %s7 = scalar_select 0, %s6, %s4
  $region1: #{tpu_custom_call.1} parent=0
    #allocation2 [shape = 'u8[262144]{0}', space=vmem, size = 0x40000, scoped, tag = 'input window, operand 1, single buffered']
    #allocation3 [shape = 's32[1]{0}', space=sflag, size = 0x4, scoped, tag = 'scoped memory for tpu_custom_call.1']
    #allocation4 [shape = 's32[1]{0}', space=sflag, size = 0x4, scoped, tag = 'scoped memory for tpu_custom_call.1']
    #allocation5 [shape = 'u8[4096]{0}', space=vmem, size = 0x1000, scoped, tag = 'output window, operand 0, single buffered']
    %8 = vsyncpa [#allocation3], 0
    %9 = vsyncpa [#allocation4], 0
    // Predicated region
    $region2: #{tpu_custom_call.1} parent=1 // pred_check
      _
    $region3: #{tpu_custom_call.1} parent=1 // pred_check_branch
      %11 = sbr.rel (0) target = $region5
    $region4: #{tpu_custom_call.1} parent=1 // pred_region
      _
    $region5: #{tpu_custom_call.1} parent=1 // pred_fallthru
      _
    // Predicated region
    $region6: #{tpu_custom_call.1} parent=1 // pred_check
      _
    $region7: #{tpu_custom_call.1} parent=1 // pred_check_branch
      %13 = sbr.rel (0) target = $region9
    $region8: #{tpu_custom_call.1} parent=1 // pred_region
      %s15 = ssub.s32 8192, 8192
      %16 = vsyncadd [#allocation3], %s15
      %s17 = sshll.u32 [#allocation2], 4
      %s18 = int_to_ptr.vmem [resolvable:$true] %s17
      %23 = dma.hbm_to_vmem [thread:$0]  %s1, 8192, %s18, [#allocation3], 64, 64, 4
    $region9: #{tpu_custom_call.1} parent=1 // pred_fallthru
      _
    // Predicated region
    $region10: #{tpu_custom_call.1} parent=1 // pred_check
      _
    $region11: #{tpu_custom_call.1} parent=1 // pred_check_branch
      %25 = sbr.rel (0) target = $region13
    $region12: #{tpu_custom_call.1} parent=1 // pred_region
      _
    $region13: #{tpu_custom_call.1} parent=1 // pred_fallthru
      _
    // Predicated region
    $region14: #{tpu_custom_call.1} parent=1 // pred_check
      _
    $region15: #{tpu_custom_call.1} parent=1 // pred_check_branch
      %27 = sbr.rel (0) target = $region17
    $region16: #{tpu_custom_call.1} parent=1 // pred_region
      %28 = dma.done [#allocation3], 8192
    $region17: #{tpu_custom_call.1} parent=1 // pred_fallthru
      _
    %v30 = vld [vmem:[%s0] sm:$0xff]
    %v31 = vld [vmem:[#allocation2] sm:$0xf]
    %v32 = vld [vmem:[#allocation2 + $0x4] sm:$0xf]
    %v33 = vld [vmem:[#allocation2 + $0x8] sm:$0xf]
    %v34 = vld [vmem:[#allocation2 + $0xc] sm:$0xf]
    %v35 = vld [vmem:[#allocation2 + $0x10] sm:$0xf]
    %v36 = vld [vmem:[#allocation2 + $0x14] sm:$0xf]
    %v37 = vld [vmem:[#allocation2 + $0x18] sm:$0xf]
    %v38 = vld [vmem:[#allocation2 + $0x1c] sm:$0xf]
    %v39 = vld [vmem:[#allocation2 + $0x20] sm:$0xf]
    %v40 = vld [vmem:[#allocation2 + $0x24] sm:$0xf]
    %v41 = vld [vmem:[#allocation2 + $0x28] sm:$0xf]
    %v42 = vld [vmem:[#allocation2 + $0x2c] sm:$0xf]
    %v43 = vld [vmem:[#allocation2 + $0x30] sm:$0xf]
    %v44 = vld [vmem:[#allocation2 + $0x34] sm:$0xf]
    %v45 = vld [vmem:[#allocation2 + $0x38] sm:$0xf]
    %v46 = vld [vmem:[#allocation2 + $0x3c] sm:$0xf]
    %v47 = vld [vmem:[%s2] sm:$0x1]
    %v48 = vunpack.c.l.bf16 %v47
    %v49 = vpack.c.bf16 %v30, %v30
    %v50 = vlaneseq
    %v51 = vshrl.u32 %v50, 7
    %v52 = vsub.s32 0, %v51
    %v53 = vrot.slane %v48, %v52
    %v70 = vunpack.c.l.b16 %v31
    %v71 = vunpack.c.l.b16 %v32
    %v72 = vunpack.c.l.b16 %v33
    %v73 = vunpack.c.l.b16 %v34
    %v74 = vunpack.c.l.b16 %v35
    %v75 = vunpack.c.l.b16 %v36
    %v76 = vunpack.c.l.b16 %v37
    %v77 = vunpack.c.l.b16 %v38
    %v78 = vunpack.c.l.b16 %v39
    %v79 = vunpack.c.l.b16 %v40
    %v80 = vunpack.c.l.b16 %v41
    %v81 = vunpack.c.l.b16 %v42
    %v82 = vunpack.c.l.b16 %v43
    %v83 = vunpack.c.l.b16 %v44
    %v84 = vunpack.c.l.b16 %v45
    %v85 = vunpack.c.l.b16 %v46
    %v86 = vpack.c.b16 %v71, %v70
    %v87 = vpack.c.b16 %v73, %v72
    %v88 = vpack.c.b16 %v75, %v74
    %v89 = vpack.c.b16 %v77, %v76
    %v90 = vpack.c.b16 %v79, %v78
    %v91 = vpack.c.b16 %v81, %v80
    %v92 = vpack.c.b16 %v83, %v82
    %v93 = vpack.c.b16 %v85, %v84
    %102 = vmatprep.subr.bf16.mxu0 0
    %103 = vmatpush1.bf16.msra.mxu0 %v93
    %104 = vmatprep.subr.bf16.mxu0 0
    %105 = vmatpush1.bf16.msra.mxu0 %v92
    %106 = vmatprep.subr.bf16.mxu0 0
    %107 = vmatpush1.bf16.msra.mxu0 %v91
    %108 = vmatprep.subr.bf16.mxu0 0
    %109 = vmatpush1.bf16.msra.mxu0 %v90
    %110 = vmatprep.subr.bf16.mxu0 0
    %111 = vmatpush1.bf16.msra.mxu0 %v89
    %112 = vmatprep.subr.bf16.mxu0 0
    %113 = vmatpush1.bf16.msra.mxu0 %v88
    %114 = vmatprep.subr.bf16.mxu0 0
    %115 = vmatpush1.bf16.msra.mxu0 %v87
    %116 = vmatprep.subr.bf16.mxu0 0
    %117 = vmatpush1.bf16.msra.mxu0 %v86
    %118 = vmatprep.subr.bf16.mxu0 0
    %119 = vmatpush2.bf16.msra.mxu0 0
    %120 = vmatprep.subr.bf16.mxu0 0
    %121 = vmatpush2.bf16.msra.mxu0 0
    %122 = vmatprep.subr.bf16.mxu0 0
    %123 = vmatpush2.bf16.msra.mxu0 0
    %124 = vmatprep.subr.bf16.mxu0 0
    %125 = vmatpush2.bf16.msra.mxu0 0
    %126 = vmatprep.subr.bf16.mxu0 0
    %127 = vmatpush2.bf16.msra.mxu0 0
    %128 = vmatprep.subr.bf16.mxu0 0
    %129 = vmatpush2.bf16.msra.mxu0 0
    %130 = vmatprep.subr.bf16.mxu0 0
    %131 = vmatpush2.bf16.msra.mxu0 0
    %132 = vmatprep.subr.bf16.mxu0 0
    %133 = vmatpush2.bf16.msra.mxu0 0
    %134 = vmatprep.mubr.bf16.mxu0 0
    %135 = vmatmul.mubr.bf16.gmra.mxu0 %v49
    %v136 = vpop.f32.mrf.mxu0
    %v137 = vadd.f32 %v53, %v136
    %v138 = vpop.f32.mrf.mxu0
    %v139 = vpop.f32.mrf.mxu0
    %v140 = vpop.f32.mrf.mxu0
    %141 = vdwg.mxu0
    %v142 = vmax.f32 %v137, 0.0
    %s143 = scalar_lea.vmem [#allocation2], 64
    %v144 = vld [vmem:[%s143] sm:$0xf]
    %v145 = vld [vmem:[%s143 + $0x4] sm:$0xf]
    %v146 = vld [vmem:[%s143 + $0x8] sm:$0xf]
    %v147 = vld [vmem:[%s143 + $0xc] sm:$0xf]
    %v148 = vld [vmem:[%s143 + $0x10] sm:$0xf]
    %v149 = vld [vmem:[%s143 + $0x14] sm:$0xf]
    %v150 = vld [vmem:[%s143 + $0x18] sm:$0xf]
    %v151 = vld [vmem:[%s143 + $0x1c] sm:$0xf]
    %v152 = vld [vmem:[%s143 + $0x20] sm:$0xf]
    %v153 = vld [vmem:[%s143 + $0x24] sm:$0xf]
    %v154 = vld [vmem:[%s143 + $0x28] sm:$0xf]
    %v155 = vld [vmem:[%s143 + $0x2c] sm:$0xf]
    %v156 = vld [vmem:[%s143 + $0x30] sm:$0xf]
    %v157 = vld [vmem:[%s143 + $0x34] sm:$0xf]
    %v158 = vld [vmem:[%s143 + $0x38] sm:$0xf]
    %v159 = vld [vmem:[%s143 + $0x3c] sm:$0xf]
    %s160 = scalar_lea.vmem %s2, 1
    %v161 = vld [vmem:[%s160] sm:$0x1]
    %v162 = vunpack.c.l.bf16 %v161
    %v163 = vpack.c.bf16 %v142, %v142
    %v164 = vlaneseq
    %v165 = vshrl.u32 %v164, 7
    %v166 = vsub.s32 0, %v165
    %v167 = vrot.slane %v162, %v166
    %v184 = vunpack.c.l.b16 %v144
    %v185 = vunpack.c.l.b16 %v145
    %v186 = vunpack.c.l.b16 %v146
    %v187 = vunpack.c.l.b16 %v147
    %v188 = vunpack.c.l.b16 %v148
    %v189 = vunpack.c.l.b16 %v149
    %v190 = vunpack.c.l.b16 %v150
    %v191 = vunpack.c.l.b16 %v151
    %v192 = vunpack.c.l.b16 %v152
    %v193 = vunpack.c.l.b16 %v153
    %v194 = vunpack.c.l.b16 %v154
    %v195 = vunpack.c.l.b16 %v155
    %v196 = vunpack.c.l.b16 %v156
    %v197 = vunpack.c.l.b16 %v157
    %v198 = vunpack.c.l.b16 %v158
    %v199 = vunpack.c.l.b16 %v159
    %v200 = vpack.c.b16 %v185, %v184
    %v201 = vpack.c.b16 %v187, %v186
    %v202 = vpack.c.b16 %v189, %v188
    %v203 = vpack.c.b16 %v191, %v190
    %v204 = vpack.c.b16 %v193, %v192
    %v205 = vpack.c.b16 %v195, %v194
    %v206 = vpack.c.b16 %v197, %v196
    %v207 = vpack.c.b16 %v199, %v198
    %216 = vmatprep.subr.bf16.mxu0 0
    %217 = vmatpush1.bf16.msra.mxu0 %v207
    %218 = vmatprep.subr.bf16.mxu0 0
    %219 = vmatpush1.bf16.msra.mxu0 %v206
    %220 = vmatprep.subr.bf16.mxu0 0
    %221 = vmatpush1.bf16.msra.mxu0 %v205
    %222 = vmatprep.subr.bf16.mxu0 0
    %223 = vmatpush1.bf16.msra.mxu0 %v204
    %224 = vmatprep.subr.bf16.mxu0 0
    %225 = vmatpush1.bf16.msra.mxu0 %v203
    %226 = vmatprep.subr.bf16.mxu0 0
    %227 = vmatpush1.bf16.msra.mxu0 %v202
    %228 = vmatprep.subr.bf16.mxu0 0
    %229 = vmatpush1.bf16.msra.mxu0 %v201
    %230 = vmatprep.subr.bf16.mxu0 0
    %231 = vmatpush1.bf16.msra.mxu0 %v200
    %232 = vmatprep.subr.bf16.mxu0 0
    %233 = vmatpush2.bf16.msra.mxu0 0
    %234 = vmatprep.subr.bf16.mxu0 0
    %235 = vmatpush2.bf16.msra.mxu0 0
    %236 = vmatprep.subr.bf16.mxu0 0
    %237 = vmatpush2.bf16.msra.mxu0 0
    %238 = vmatprep.subr.bf16.mxu0 0
    %239 = vmatpush2.bf16.msra.mxu0 0
    %240 = vmatprep.subr.bf16.mxu0 0
    %241 = vmatpush2.bf16.msra.mxu0 0
    %242 = vmatprep.subr.bf16.mxu0 0
    %243 = vmatpush2.bf16.msra.mxu0 0
    %244 = vmatprep.subr.bf16.mxu0 0
    %245 = vmatpush2.bf16.msra.mxu0 0
    %246 = vmatprep.subr.bf16.mxu0 0
    %247 = vmatpush2.bf16.msra.mxu0 0
    %248 = vmatprep.mubr.bf16.mxu0 0
    %249 = vmatmul.mubr.bf16.gmra.mxu0 %v163
    %v250 = vpop.f32.mrf.mxu0
    %v251 = vadd.f32 %v167, %v250
    %v252 = vpop.f32.mrf.mxu0
    %v253 = vpop.f32.mrf.mxu0
    %v254 = vpop.f32.mrf.mxu0
    %255 = vdwg.mxu0
    %v256 = vmax.f32 %v251, 0.0
    %s257 = scalar_lea.vmem [#allocation2], 128
    %v258 = vld [vmem:[%s257] sm:$0xf]
    %v259 = vld [vmem:[%s257 + $0x4] sm:$0xf]
    %v260 = vld [vmem:[%s257 + $0x8] sm:$0xf]
    %v261 = vld [vmem:[%s257 + $0xc] sm:$0xf]
    %v262 = vld [vmem:[%s257 + $0x10] sm:$0xf]
    %v263 = vld [vmem:[%s257 + $0x14] sm:$0xf]
    %v264 = vld [vmem:[%s257 + $0x18] sm:$0xf]
    %v265 = vld [vmem:[%s257 + $0x1c] sm:$0xf]
    %v266 = vld [vmem:[%s257 + $0x20] sm:$0xf]
    %v267 = vld [vmem:[%s257 + $0x24] sm:$0xf]
    %v268 = vld [vmem:[%s257 + $0x28] sm:$0xf]
    %v269 = vld [vmem:[%s257 + $0x2c] sm:$0xf]
    %v270 = vld [vmem:[%s257 + $0x30] sm:$0xf]
    %v271 = vld [vmem:[%s257 + $0x34] sm:$0xf]
    %v272 = vld [vmem:[%s257 + $0x38] sm:$0xf]
    %v273 = vld [vmem:[%s257 + $0x3c] sm:$0xf]
    %s274 = scalar_lea.vmem %s2, 2
    %v275 = vld [vmem:[%s274] sm:$0x1]
    %v276 = vunpack.c.l.bf16 %v275
    %v277 = vpack.c.bf16 %v256, %v256
    %v278 = vlaneseq
    %v279 = vshrl.u32 %v278, 7
    %v280 = vsub.s32 0, %v279
    %v281 = vrot.slane %v276, %v280
    %v298 = vunpack.c.l.b16 %v258
    %v299 = vunpack.c.l.b16 %v259
    %v300 = vunpack.c.l.b16 %v260
    %v301 = vunpack.c.l.b16 %v261
    %v302 = vunpack.c.l.b16 %v262
    %v303 = vunpack.c.l.b16 %v263
    %v304 = vunpack.c.l.b16 %v264
    %v305 = vunpack.c.l.b16 %v265
    %v306 = vunpack.c.l.b16 %v266
    %v307 = vunpack.c.l.b16 %v267
    %v308 = vunpack.c.l.b16 %v268
    %v309 = vunpack.c.l.b16 %v269
    %v310 = vunpack.c.l.b16 %v270
    %v311 = vunpack.c.l.b16 %v271
    %v312 = vunpack.c.l.b16 %v272
    %v313 = vunpack.c.l.b16 %v273
    %v314 = vpack.c.b16 %v299, %v298
    %v315 = vpack.c.b16 %v301, %v300
    %v316 = vpack.c.b16 %v303, %v302
    %v317 = vpack.c.b16 %v305, %v304
    %v318 = vpack.c.b16 %v307, %v306
    %v319 = vpack.c.b16 %v309, %v308
    %v320 = vpack.c.b16 %v311, %v310
    %v321 = vpack.c.b16 %v313, %v312
    %330 = vmatprep.subr.bf16.mxu0 0
    %331 = vmatpush1.bf16.msra.mxu0 %v321
    %332 = vmatprep.subr.bf16.mxu0 0
    %333 = vmatpush1.bf16.msra.mxu0 %v320
    %334 = vmatprep.subr.bf16.mxu0 0
    %335 = vmatpush1.bf16.msra.mxu0 %v319
    %336 = vmatprep.subr.bf16.mxu0 0
    %337 = vmatpush1.bf16.msra.mxu0 %v318
    %338 = vmatprep.subr.bf16.mxu0 0
    %339 = vmatpush1.bf16.msra.mxu0 %v317
    %340 = vmatprep.subr.bf16.mxu0 0
    %341 = vmatpush1.bf16.msra.mxu0 %v316
    %342 = vmatprep.subr.bf16.mxu0 0
    %343 = vmatpush1.bf16.msra.mxu0 %v315
    %344 = vmatprep.subr.bf16.mxu0 0
    %345 = vmatpush1.bf16.msra.mxu0 %v314
    %346 = vmatprep.subr.bf16.mxu0 0
    %347 = vmatpush2.bf16.msra.mxu0 0
    %348 = vmatprep.subr.bf16.mxu0 0
    %349 = vmatpush2.bf16.msra.mxu0 0
    %350 = vmatprep.subr.bf16.mxu0 0
    %351 = vmatpush2.bf16.msra.mxu0 0
    %352 = vmatprep.subr.bf16.mxu0 0
    %353 = vmatpush2.bf16.msra.mxu0 0
    %354 = vmatprep.subr.bf16.mxu0 0
    %355 = vmatpush2.bf16.msra.mxu0 0
    %356 = vmatprep.subr.bf16.mxu0 0
    %357 = vmatpush2.bf16.msra.mxu0 0
    %358 = vmatprep.subr.bf16.mxu0 0
    %359 = vmatpush2.bf16.msra.mxu0 0
    %360 = vmatprep.subr.bf16.mxu0 0
    %361 = vmatpush2.bf16.msra.mxu0 0
    %362 = vmatprep.mubr.bf16.mxu0 0
    %363 = vmatmul.mubr.bf16.gmra.mxu0 %v277
    %v364 = vpop.f32.mrf.mxu0
    %v365 = vadd.f32 %v281, %v364
    %v366 = vpop.f32.mrf.mxu0
    %v367 = vpop.f32.mrf.mxu0
    %v368 = vpop.f32.mrf.mxu0
    %369 = vdwg.mxu0
    %v370 = vmax.f32 %v365, 0.0
    %s371 = scalar_lea.vmem [#allocation2], 192
    %v372 = vld [vmem:[%s371] sm:$0xf]
    %v373 = vld [vmem:[%s371 + $0x4] sm:$0xf]
    %v374 = vld [vmem:[%s371 + $0x8] sm:$0xf]
    %v375 = vld [vmem:[%s371 + $0xc] sm:$0xf]
    %v376 = vld [vmem:[%s371 + $0x10] sm:$0xf]
    %v377 = vld [vmem:[%s371 + $0x14] sm:$0xf]
    %v378 = vld [vmem:[%s371 + $0x18] sm:$0xf]
    %v379 = vld [vmem:[%s371 + $0x1c] sm:$0xf]
    %v380 = vld [vmem:[%s371 + $0x20] sm:$0xf]
    %v381 = vld [vmem:[%s371 + $0x24] sm:$0xf]
    %v382 = vld [vmem:[%s371 + $0x28] sm:$0xf]
    %v383 = vld [vmem:[%s371 + $0x2c] sm:$0xf]
    %v384 = vld [vmem:[%s371 + $0x30] sm:$0xf]
    %v385 = vld [vmem:[%s371 + $0x34] sm:$0xf]
    %v386 = vld [vmem:[%s371 + $0x38] sm:$0xf]
    %v387 = vld [vmem:[%s371 + $0x3c] sm:$0xf]
    %s388 = scalar_lea.vmem %s2, 3
    %v389 = vld [vmem:[%s388] sm:$0x1]
    %v390 = vunpack.c.l.bf16 %v389
    %v391 = vpack.c.bf16 %v370, %v370
    %v392 = vlaneseq
    %v393 = vshrl.u32 %v392, 7
    %v394 = vsub.s32 0, %v393
    %v395 = vrot.slane %v390, %v394
    %v412 = vunpack.c.l.b16 %v372
    %v413 = vunpack.c.l.b16 %v373
    %v414 = vunpack.c.l.b16 %v374
    %v415 = vunpack.c.l.b16 %v375
    %v416 = vunpack.c.l.b16 %v376
    %v417 = vunpack.c.l.b16 %v377
    %v418 = vunpack.c.l.b16 %v378
    %v419 = vunpack.c.l.b16 %v379
    %v420 = vunpack.c.l.b16 %v380
    %v421 = vunpack.c.l.b16 %v381
    %v422 = vunpack.c.l.b16 %v382
    %v423 = vunpack.c.l.b16 %v383
    %v424 = vunpack.c.l.b16 %v384
    %v425 = vunpack.c.l.b16 %v385
    %v426 = vunpack.c.l.b16 %v386
    %v427 = vunpack.c.l.b16 %v387
    %v428 = vpack.c.b16 %v413, %v412
    %v429 = vpack.c.b16 %v415, %v414
    %v430 = vpack.c.b16 %v417, %v416
    %v431 = vpack.c.b16 %v419, %v418
    %v432 = vpack.c.b16 %v421, %v420
    %v433 = vpack.c.b16 %v423, %v422
    %v434 = vpack.c.b16 %v425, %v424
    %v435 = vpack.c.b16 %v427, %v426
    %444 = vmatprep.subr.bf16.mxu0 0
    %445 = vmatpush1.bf16.msra.mxu0 %v435
    %446 = vmatprep.subr.bf16.mxu0 0
    %447 = vmatpush1.bf16.msra.mxu0 %v434
    %448 = vmatprep.subr.bf16.mxu0 0
    %449 = vmatpush1.bf16.msra.mxu0 %v433
    %450 = vmatprep.subr.bf16.mxu0 0
    %451 = vmatpush1.bf16.msra.mxu0 %v432
    %452 = vmatprep.subr.bf16.mxu0 0
    %453 = vmatpush1.bf16.msra.mxu0 %v431
    %454 = vmatprep.subr.bf16.mxu0 0
    %455 = vmatpush1.bf16.msra.mxu0 %v430
    %456 = vmatprep.subr.bf16.mxu0 0
    %457 = vmatpush1.bf16.msra.mxu0 %v429
    %458 = vmatprep.subr.bf16.mxu0 0
    %459 = vmatpush1.bf16.msra.mxu0 %v428
    %460 = vmatprep.subr.bf16.mxu0 0
    %461 = vmatpush2.bf16.msra.mxu0 0
    %462 = vmatprep.subr.bf16.mxu0 0
    %463 = vmatpush2.bf16.msra.mxu0 0
    %464 = vmatprep.subr.bf16.mxu0 0
    %465 = vmatpush2.bf16.msra.mxu0 0
    %466 = vmatprep.subr.bf16.mxu0 0
    %467 = vmatpush2.bf16.msra.mxu0 0
    %468 = vmatprep.subr.bf16.mxu0 0
    %469 = vmatpush2.bf16.msra.mxu0 0
    %470 = vmatprep.subr.bf16.mxu0 0
    %471 = vmatpush2.bf16.msra.mxu0 0
    %472 = vmatprep.subr.bf16.mxu0 0
    %473 = vmatpush2.bf16.msra.mxu0 0
    %474 = vmatprep.subr.bf16.mxu0 0
    %475 = vmatpush2.bf16.msra.mxu0 0
    %476 = vmatprep.mubr.bf16.mxu0 0
    %477 = vmatmul.mubr.bf16.gmra.mxu0 %v391
    %v478 = vpop.f32.mrf.mxu0
    %v479 = vadd.f32 %v395, %v478
    %v480 = vpop.f32.mrf.mxu0
    %v481 = vpop.f32.mrf.mxu0
    %v482 = vpop.f32.mrf.mxu0
    %483 = vdwg.mxu0
    %v484 = vmax.f32 %v479, 0.0
    %s485 = scalar_lea.vmem [#allocation2], 256
    %v486 = vld [vmem:[%s485] sm:$0xf]
    %v487 = vld [vmem:[%s485 + $0x4] sm:$0xf]
    %v488 = vld [vmem:[%s485 + $0x8] sm:$0xf]
    %v489 = vld [vmem:[%s485 + $0xc] sm:$0xf]
    %v490 = vld [vmem:[%s485 + $0x10] sm:$0xf]
    %v491 = vld [vmem:[%s485 + $0x14] sm:$0xf]
    %v492 = vld [vmem:[%s485 + $0x18] sm:$0xf]
    %v493 = vld [vmem:[%s485 + $0x1c] sm:$0xf]
    %v494 = vld [vmem:[%s485 + $0x20] sm:$0xf]
    %v495 = vld [vmem:[%s485 + $0x24] sm:$0xf]
    %v496 = vld [vmem:[%s485 + $0x28] sm:$0xf]
    %v497 = vld [vmem:[%s485 + $0x2c] sm:$0xf]
    %v498 = vld [vmem:[%s485 + $0x30] sm:$0xf]
    %v499 = vld [vmem:[%s485 + $0x34] sm:$0xf]
    %v500 = vld [vmem:[%s485 + $0x38] sm:$0xf]
    %v501 = vld [vmem:[%s485 + $0x3c] sm:$0xf]
    %s502 = scalar_lea.vmem %s2, 4
    %v503 = vld [vmem:[%s502] sm:$0x1]
    %v504 = vunpack.c.l.bf16 %v503
    %v505 = vpack.c.bf16 %v484, %v484
    %v506 = vlaneseq
    %v507 = vshrl.u32 %v506, 7
    %v508 = vsub.s32 0, %v507
    %v509 = vrot.slane %v504, %v508
    %v526 = vunpack.c.l.b16 %v486
    %v527 = vunpack.c.l.b16 %v487
    %v528 = vunpack.c.l.b16 %v488
    %v529 = vunpack.c.l.b16 %v489
    %v530 = vunpack.c.l.b16 %v490
    %v531 = vunpack.c.l.b16 %v491
    %v532 = vunpack.c.l.b16 %v492
    %v533 = vunpack.c.l.b16 %v493
    %v534 = vunpack.c.l.b16 %v494
    %v535 = vunpack.c.l.b16 %v495
    %v536 = vunpack.c.l.b16 %v496
    %v537 = vunpack.c.l.b16 %v497
    %v538 = vunpack.c.l.b16 %v498
    %v539 = vunpack.c.l.b16 %v499
    %v540 = vunpack.c.l.b16 %v500
    %v541 = vunpack.c.l.b16 %v501
    %v542 = vpack.c.b16 %v527, %v526
    %v543 = vpack.c.b16 %v529, %v528
    %v544 = vpack.c.b16 %v531, %v530
    %v545 = vpack.c.b16 %v533, %v532
    %v546 = vpack.c.b16 %v535, %v534
    %v547 = vpack.c.b16 %v537, %v536
    %v548 = vpack.c.b16 %v539, %v538
    %v549 = vpack.c.b16 %v541, %v540
    %558 = vmatprep.subr.bf16.mxu0 0
    %559 = vmatpush1.bf16.msra.mxu0 %v549
    %560 = vmatprep.subr.bf16.mxu0 0
    %561 = vmatpush1.bf16.msra.mxu0 %v548
    %562 = vmatprep.subr.bf16.mxu0 0
    %563 = vmatpush1.bf16.msra.mxu0 %v547
    %564 = vmatprep.subr.bf16.mxu0 0
    %565 = vmatpush1.bf16.msra.mxu0 %v546
    %566 = vmatprep.subr.bf16.mxu0 0
    %567 = vmatpush1.bf16.msra.mxu0 %v545
    %568 = vmatprep.subr.bf16.mxu0 0
    %569 = vmatpush1.bf16.msra.mxu0 %v544
    %570 = vmatprep.subr.bf16.mxu0 0
    %571 = vmatpush1.bf16.msra.mxu0 %v543
    %572 = vmatprep.subr.bf16.mxu0 0
    %573 = vmatpush1.bf16.msra.mxu0 %v542
    %574 = vmatprep.subr.bf16.mxu0 0
    %575 = vmatpush2.bf16.msra.mxu0 0
    %576 = vmatprep.subr.bf16.mxu0 0
    %577 = vmatpush2.bf16.msra.mxu0 0
    %578 = vmatprep.subr.bf16.mxu0 0
    %579 = vmatpush2.bf16.msra.mxu0 0
    %580 = vmatprep.subr.bf16.mxu0 0
    %581 = vmatpush2.bf16.msra.mxu0 0
    %582 = vmatprep.subr.bf16.mxu0 0
    %583 = vmatpush2.bf16.msra.mxu0 0
    %584 = vmatprep.subr.bf16.mxu0 0
    %585 = vmatpush2.bf16.msra.mxu0 0
    %586 = vmatprep.subr.bf16.mxu0 0
    %587 = vmatpush2.bf16.msra.mxu0 0
    %588 = vmatprep.subr.bf16.mxu0 0
    %589 = vmatpush2.bf16.msra.mxu0 0
    %590 = vmatprep.mubr.bf16.mxu0 0
    %591 = vmatmul.mubr.bf16.gmra.mxu0 %v505
    %v592 = vpop.f32.mrf.mxu0
    %v593 = vadd.f32 %v509, %v592
    %v594 = vpop.f32.mrf.mxu0
    %v595 = vpop.f32.mrf.mxu0
    %v596 = vpop.f32.mrf.mxu0
    %597 = vdwg.mxu0
    %v598 = vmax.f32 %v593, 0.0
    %s599 = scalar_lea.vmem [#allocation2], 320
    %v600 = vld [vmem:[%s599] sm:$0xf]
    %v601 = vld [vmem:[%s599 + $0x4] sm:$0xf]
    %v602 = vld [vmem:[%s599 + $0x8] sm:$0xf]
    %v603 = vld [vmem:[%s599 + $0xc] sm:$0xf]
    %v604 = vld [vmem:[%s599 + $0x10] sm:$0xf]
    %v605 = vld [vmem:[%s599 + $0x14] sm:$0xf]
    %v606 = vld [vmem:[%s599 + $0x18] sm:$0xf]
    %v607 = vld [vmem:[%s599 + $0x1c] sm:$0xf]
    %v608 = vld [vmem:[%s599 + $0x20] sm:$0xf]
    %v609 = vld [vmem:[%s599 + $0x24] sm:$0xf]
    %v610 = vld [vmem:[%s599 + $0x28] sm:$0xf]
    %v611 = vld [vmem:[%s599 + $0x2c] sm:$0xf]
    %v612 = vld [vmem:[%s599 + $0x30] sm:$0xf]
    %v613 = vld [vmem:[%s599 + $0x34] sm:$0xf]
    %v614 = vld [vmem:[%s599 + $0x38] sm:$0xf]
    %v615 = vld [vmem:[%s599 + $0x3c] sm:$0xf]
    %s616 = scalar_lea.vmem %s2, 5
    %v617 = vld [vmem:[%s616] sm:$0x1]
    %v618 = vunpack.c.l.bf16 %v617
    %v619 = vpack.c.bf16 %v598, %v598
    %v620 = vlaneseq
    %v621 = vshrl.u32 %v620, 7
    %v622 = vsub.s32 0, %v621
    %v623 = vrot.slane %v618, %v622
    %v640 = vunpack.c.l.b16 %v600
    %v641 = vunpack.c.l.b16 %v601
    %v642 = vunpack.c.l.b16 %v602
    %v643 = vunpack.c.l.b16 %v603
    %v644 = vunpack.c.l.b16 %v604
    %v645 = vunpack.c.l.b16 %v605
    %v646 = vunpack.c.l.b16 %v606
    %v647 = vunpack.c.l.b16 %v607
    %v648 = vunpack.c.l.b16 %v608
    %v649 = vunpack.c.l.b16 %v609
    %v650 = vunpack.c.l.b16 %v610
    %v651 = vunpack.c.l.b16 %v611
    %v652 = vunpack.c.l.b16 %v612
    %v653 = vunpack.c.l.b16 %v613
    %v654 = vunpack.c.l.b16 %v614
    %v655 = vunpack.c.l.b16 %v615
    %v656 = vpack.c.b16 %v641, %v640
    %v657 = vpack.c.b16 %v643, %v642
    %v658 = vpack.c.b16 %v645, %v644
    %v659 = vpack.c.b16 %v647, %v646
    %v660 = vpack.c.b16 %v649, %v648
    %v661 = vpack.c.b16 %v651, %v650
    %v662 = vpack.c.b16 %v653, %v652
    %v663 = vpack.c.b16 %v655, %v654
    %672 = vmatprep.subr.bf16.mxu0 0
    %673 = vmatpush1.bf16.msra.mxu0 %v663
    %674 = vmatprep.subr.bf16.mxu0 0
    %675 = vmatpush1.bf16.msra.mxu0 %v662
    %676 = vmatprep.subr.bf16.mxu0 0
    %677 = vmatpush1.bf16.msra.mxu0 %v661
    %678 = vmatprep.subr.bf16.mxu0 0
    %679 = vmatpush1.bf16.msra.mxu0 %v660
    %680 = vmatprep.subr.bf16.mxu0 0
    %681 = vmatpush1.bf16.msra.mxu0 %v659
    %682 = vmatprep.subr.bf16.mxu0 0
    %683 = vmatpush1.bf16.msra.mxu0 %v658
    %684 = vmatprep.subr.bf16.mxu0 0
    %685 = vmatpush1.bf16.msra.mxu0 %v657
    %686 = vmatprep.subr.bf16.mxu0 0
    %687 = vmatpush1.bf16.msra.mxu0 %v656
    %688 = vmatprep.subr.bf16.mxu0 0
    %689 = vmatpush2.bf16.msra.mxu0 0
    %690 = vmatprep.subr.bf16.mxu0 0
    %691 = vmatpush2.bf16.msra.mxu0 0
    %692 = vmatprep.subr.bf16.mxu0 0
    %693 = vmatpush2.bf16.msra.mxu0 0
    %694 = vmatprep.subr.bf16.mxu0 0
    %695 = vmatpush2.bf16.msra.mxu0 0
    %696 = vmatprep.subr.bf16.mxu0 0
    %697 = vmatpush2.bf16.msra.mxu0 0
    %698 = vmatprep.subr.bf16.mxu0 0
    %699 = vmatpush2.bf16.msra.mxu0 0
    %700 = vmatprep.subr.bf16.mxu0 0
    %701 = vmatpush2.bf16.msra.mxu0 0
    %702 = vmatprep.subr.bf16.mxu0 0
    %703 = vmatpush2.bf16.msra.mxu0 0
    %704 = vmatprep.mubr.bf16.mxu0 0
    %705 = vmatmul.mubr.bf16.gmra.mxu0 %v619
    %v706 = vpop.f32.mrf.mxu0
    %v707 = vadd.f32 %v623, %v706
    %v708 = vpop.f32.mrf.mxu0
    %v709 = vpop.f32.mrf.mxu0
    %v710 = vpop.f32.mrf.mxu0
    %711 = vdwg.mxu0
    %v712 = vmax.f32 %v707, 0.0
    %s713 = scalar_lea.vmem [#allocation2], 384
    %v714 = vld [vmem:[%s713] sm:$0xf]
    %v715 = vld [vmem:[%s713 + $0x4] sm:$0xf]
    %v716 = vld [vmem:[%s713 + $0x8] sm:$0xf]
    %v717 = vld [vmem:[%s713 + $0xc] sm:$0xf]
    %v718 = vld [vmem:[%s713 + $0x10] sm:$0xf]
    %v719 = vld [vmem:[%s713 + $0x14] sm:$0xf]
    %v720 = vld [vmem:[%s713 + $0x18] sm:$0xf]
    %v721 = vld [vmem:[%s713 + $0x1c] sm:$0xf]
    %v722 = vld [vmem:[%s713 + $0x20] sm:$0xf]
    %v723 = vld [vmem:[%s713 + $0x24] sm:$0xf]
    %v724 = vld [vmem:[%s713 + $0x28] sm:$0xf]
    %v725 = vld [vmem:[%s713 + $0x2c] sm:$0xf]
    %v726 = vld [vmem:[%s713 + $0x30] sm:$0xf]
    %v727 = vld [vmem:[%s713 + $0x34] sm:$0xf]
    %v728 = vld [vmem:[%s713 + $0x38] sm:$0xf]
    %v729 = vld [vmem:[%s713 + $0x3c] sm:$0xf]
    %s730 = scalar_lea.vmem %s2, 6
    %v731 = vld [vmem:[%s730] sm:$0x1]
    %v732 = vunpack.c.l.bf16 %v731
    %v733 = vpack.c.bf16 %v712, %v712
    %v734 = vlaneseq
    %v735 = vshrl.u32 %v734, 7
    %v736 = vsub.s32 0, %v735
    %v737 = vrot.slane %v732, %v736
    %v754 = vunpack.c.l.b16 %v714
    %v755 = vunpack.c.l.b16 %v715
    %v756 = vunpack.c.l.b16 %v716
    %v757 = vunpack.c.l.b16 %v717
    %v758 = vunpack.c.l.b16 %v718
    %v759 = vunpack.c.l.b16 %v719
    %v760 = vunpack.c.l.b16 %v720
    %v761 = vunpack.c.l.b16 %v721
    %v762 = vunpack.c.l.b16 %v722
    %v763 = vunpack.c.l.b16 %v723
    %v764 = vunpack.c.l.b16 %v724
    %v765 = vunpack.c.l.b16 %v725
    %v766 = vunpack.c.l.b16 %v726
    %v767 = vunpack.c.l.b16 %v727
    %v768 = vunpack.c.l.b16 %v728
    %v769 = vunpack.c.l.b16 %v729
    %v770 = vpack.c.b16 %v755, %v754
    %v771 = vpack.c.b16 %v757, %v756
    %v772 = vpack.c.b16 %v759, %v758
    %v773 = vpack.c.b16 %v761, %v760
    %v774 = vpack.c.b16 %v763, %v762
    %v775 = vpack.c.b16 %v765, %v764
    %v776 = vpack.c.b16 %v767, %v766
    %v777 = vpack.c.b16 %v769, %v768
    %786 = vmatprep.subr.bf16.mxu0 0
    %787 = vmatpush1.bf16.msra.mxu0 %v777
    %788 = vmatprep.subr.bf16.mxu0 0
    %789 = vmatpush1.bf16.msra.mxu0 %v776
    %790 = vmatprep.subr.bf16.mxu0 0
    %791 = vmatpush1.bf16.msra.mxu0 %v775
    %792 = vmatprep.subr.bf16.mxu0 0
    %793 = vmatpush1.bf16.msra.mxu0 %v774
    %794 = vmatprep.subr.bf16.mxu0 0
    %795 = vmatpush1.bf16.msra.mxu0 %v773
    %796 = vmatprep.subr.bf16.mxu0 0
    %797 = vmatpush1.bf16.msra.mxu0 %v772
    %798 = vmatprep.subr.bf16.mxu0 0
    %799 = vmatpush1.bf16.msra.mxu0 %v771
    %800 = vmatprep.subr.bf16.mxu0 0
    %801 = vmatpush1.bf16.msra.mxu0 %v770
    %802 = vmatprep.subr.bf16.mxu0 0
    %803 = vmatpush2.bf16.msra.mxu0 0
    %804 = vmatprep.subr.bf16.mxu0 0
    %805 = vmatpush2.bf16.msra.mxu0 0
    %806 = vmatprep.subr.bf16.mxu0 0
    %807 = vmatpush2.bf16.msra.mxu0 0
    %808 = vmatprep.subr.bf16.mxu0 0
    %809 = vmatpush2.bf16.msra.mxu0 0
    %810 = vmatprep.subr.bf16.mxu0 0
    %811 = vmatpush2.bf16.msra.mxu0 0
    %812 = vmatprep.subr.bf16.mxu0 0
    %813 = vmatpush2.bf16.msra.mxu0 0
    %814 = vmatprep.subr.bf16.mxu0 0
    %815 = vmatpush2.bf16.msra.mxu0 0
    %816 = vmatprep.subr.bf16.mxu0 0
    %817 = vmatpush2.bf16.msra.mxu0 0
    %818 = vmatprep.mubr.bf16.mxu0 0
    %819 = vmatmul.mubr.bf16.gmra.mxu0 %v733
    %v820 = vpop.f32.mrf.mxu0
    %v821 = vadd.f32 %v737, %v820
    %v822 = vpop.f32.mrf.mxu0
    %v823 = vpop.f32.mrf.mxu0
    %v824 = vpop.f32.mrf.mxu0
    %825 = vdwg.mxu0
    %v826 = vmax.f32 %v821, 0.0
    %s827 = scalar_lea.vmem [#allocation2], 448
    %v828 = vld [vmem:[%s827] sm:$0xf]
    %v829 = vld [vmem:[%s827 + $0x4] sm:$0xf]
    %v830 = vld [vmem:[%s827 + $0x8] sm:$0xf]
    %v831 = vld [vmem:[%s827 + $0xc] sm:$0xf]
    %v832 = vld [vmem:[%s827 + $0x10] sm:$0xf]
    %v833 = vld [vmem:[%s827 + $0x14] sm:$0xf]
    %v834 = vld [vmem:[%s827 + $0x18] sm:$0xf]
    %v835 = vld [vmem:[%s827 + $0x1c] sm:$0xf]
    %v836 = vld [vmem:[%s827 + $0x20] sm:$0xf]
    %v837 = vld [vmem:[%s827 + $0x24] sm:$0xf]
    %v838 = vld [vmem:[%s827 + $0x28] sm:$0xf]
    %v839 = vld [vmem:[%s827 + $0x2c] sm:$0xf]
    %v840 = vld [vmem:[%s827 + $0x30] sm:$0xf]
    %v841 = vld [vmem:[%s827 + $0x34] sm:$0xf]
    %v842 = vld [vmem:[%s827 + $0x38] sm:$0xf]
    %v843 = vld [vmem:[%s827 + $0x3c] sm:$0xf]
    %s844 = scalar_lea.vmem %s2, 7
    %v845 = vld [vmem:[%s844] sm:$0x1]
    %v846 = vunpack.c.l.bf16 %v845
    %v847 = vpack.c.bf16 %v826, %v826
    %v848 = vlaneseq
    %v849 = vshrl.u32 %v848, 7
    %v850 = vsub.s32 0, %v849
    %v851 = vrot.slane %v846, %v850
    %v868 = vunpack.c.l.b16 %v828
    %v869 = vunpack.c.l.b16 %v829
    %v870 = vunpack.c.l.b16 %v830
    %v871 = vunpack.c.l.b16 %v831
    %v872 = vunpack.c.l.b16 %v832
    %v873 = vunpack.c.l.b16 %v833
    %v874 = vunpack.c.l.b16 %v834
    %v875 = vunpack.c.l.b16 %v835
    %v876 = vunpack.c.l.b16 %v836
    %v877 = vunpack.c.l.b16 %v837
    %v878 = vunpack.c.l.b16 %v838
    %v879 = vunpack.c.l.b16 %v839
    %v880 = vunpack.c.l.b16 %v840
    %v881 = vunpack.c.l.b16 %v841
    %v882 = vunpack.c.l.b16 %v842
    %v883 = vunpack.c.l.b16 %v843
    %v884 = vpack.c.b16 %v869, %v868
    %v885 = vpack.c.b16 %v871, %v870
    %v886 = vpack.c.b16 %v873, %v872
    %v887 = vpack.c.b16 %v875, %v874
    %v888 = vpack.c.b16 %v877, %v876
    %v889 = vpack.c.b16 %v879, %v878
    %v890 = vpack.c.b16 %v881, %v880
    %v891 = vpack.c.b16 %v883, %v882
    %900 = vmatprep.subr.bf16.mxu0 0
    %901 = vmatpush1.bf16.msra.mxu0 %v891
    %902 = vmatprep.subr.bf16.mxu0 0
    %903 = vmatpush1.bf16.msra.mxu0 %v890
    %904 = vmatprep.subr.bf16.mxu0 0
    %905 = vmatpush1.bf16.msra.mxu0 %v889
    %906 = vmatprep.subr.bf16.mxu0 0
    %907 = vmatpush1.bf16.msra.mxu0 %v888
    %908 = vmatprep.subr.bf16.mxu0 0
    %909 = vmatpush1.bf16.msra.mxu0 %v887
    %910 = vmatprep.subr.bf16.mxu0 0
    %911 = vmatpush1.bf16.msra.mxu0 %v886
    %912 = vmatprep.subr.bf16.mxu0 0
    %913 = vmatpush1.bf16.msra.mxu0 %v885
    %914 = vmatprep.subr.bf16.mxu0 0
    %915 = vmatpush1.bf16.msra.mxu0 %v884
    %916 = vmatprep.subr.bf16.mxu0 0
    %917 = vmatpush2.bf16.msra.mxu0 0
    %918 = vmatprep.subr.bf16.mxu0 0
    %919 = vmatpush2.bf16.msra.mxu0 0
    %920 = vmatprep.subr.bf16.mxu0 0
    %921 = vmatpush2.bf16.msra.mxu0 0
    %922 = vmatprep.subr.bf16.mxu0 0
    %923 = vmatpush2.bf16.msra.mxu0 0
    %924 = vmatprep.subr.bf16.mxu0 0
    %925 = vmatpush2.bf16.msra.mxu0 0
    %926 = vmatprep.subr.bf16.mxu0 0
    %927 = vmatpush2.bf16.msra.mxu0 0
    %928 = vmatprep.subr.bf16.mxu0 0
    %929 = vmatpush2.bf16.msra.mxu0 0
    %930 = vmatprep.subr.bf16.mxu0 0
    %931 = vmatpush2.bf16.msra.mxu0 0
    %932 = vmatprep.mubr.bf16.mxu0 0
    %933 = vmatmul.mubr.bf16.gmra.mxu0 %v847
    %v934 = vpop.f32.mrf.mxu0
    %v935 = vadd.f32 %v851, %v934
    %v936 = vpop.f32.mrf.mxu0
    %v937 = vpop.f32.mrf.mxu0
    %v938 = vpop.f32.mrf.mxu0
    %939 = vdwg.mxu0
    %v940 = vmax.f32 %v935, 0.0
    %941 = vst [vmem:[#allocation5] sm:$0xff] %v940
    // Predicated region
    $region18: #{tpu_custom_call.1} parent=1 // pred_check
      _
    $region19: #{tpu_custom_call.1} parent=1 // pred_check_branch
      %943 = sbr.rel (0) target = $region21
    $region20: #{tpu_custom_call.1} parent=1 // pred_region
      %s945 = ssub.s32 128, 128
      %946 = vsyncadd [#allocation4], %s945
      %s948 = sshll.u32 [#allocation5], 4
      %s949 = int_to_ptr.vmem [resolvable:$true] %s948
      %951 = dma.vmem_to_hbm [thread:$0]  %s949, 128, %s3, [#allocation4]
    $region21: #{tpu_custom_call.1} parent=1 // pred_fallthru
      _
    // Predicated region
    $region22: #{tpu_custom_call.1} parent=1 // pred_check
      _
    $region23: #{tpu_custom_call.1} parent=1 // pred_check_branch
      %953 = sbr.rel (0) target = $region25
    $region24: #{tpu_custom_call.1} parent=1 // pred_region
      %954 = dma.done [#allocation4], 128
    $region25: #{tpu_custom_call.1} parent=1 // pred_fallthru
      _
    %955 = vsyncpa [#allocation3], 1
    %956 = vsyncpa [#allocation4], 1

</llo_original>
